<compile_context>
chip_gen: v7x
topology: tpu7x:2x2x1
jax: 0.10.0
libtpu: 0.0.40
codegen_flags: <defaults>
</compile_context>

<pallas_src>
import jax
import jax.numpy as jnp
from jax.experimental import pallas as pl
from jax.experimental.pallas import tpu as pltpu

EPS = 1e-5


def _band_weight(w_hwio, W):
    """(3, 3, Cin, Cout) HWIO -> (3*W*Cin, W*Cout) banded conv matrix.

    band[ky, wi, ci, wo, co] = w[ky, wi - wo + 1, ci, co] when |wi - wo| <= 1,
    else 0 -- the zeros bake the 'SAME' padding along W into the weight.
    """
    _, _, Cin, Cout = w_hwio.shape
    band = jnp.zeros((3, W, Cin, W, Cout), w_hwio.dtype)
    for kx in range(3):
        for wo in range(W):
            wi = wo + kx - 1
            if 0 <= wi < W:
                band = band.at[:, wi, :, wo, :].set(w_hwio[:, kx, :, :])
    return band.reshape(3 * W * Cin, W * Cout)


def residual_block(x_nhwc, w1, b1, g1, be1, w2, b2, g2, be2):
    """x_nhwc: (N, H, W, C) f32; w*: (3, 3, C, C) HWIO; b*/g*/be*: (C,)."""
    del b1, b2  # conv bias cancels exactly under training-mode batch-stat BN
    N, H, W, C = x_nhwc.shape
    WC = W * C
    NH = N * H
    f32 = jnp.float32
    inv_m = 1.0 / float(N * H * W)

    def kernel(x_ref, w1_ref, w2_ref, p_ref, out_ref, xh_ref):
        # x_ref  : (N, H, W*C)     activations, lane-dense rows
        # w*_ref : (3*W*C, W*C)    banded conv weight (host-built)
        # p_ref  : (4, W*C)        [gamma1, beta1, gamma2, beta2] tiled W times
        # xh_ref : (N, H+2, W*C)   H-halo scratch (rows 0 and H+1 kept zero)

        # Per-channel averaging matrix, built in-kernel (no DMA, hoisted once):
        # avg[i, j] = inv_m if lane i and lane j carry the same channel.
        ri = jax.lax.broadcasted_iota(jnp.int32, (WC, WC), 0)
        ci = jax.lax.broadcasted_iota(jnp.int32, (WC, WC), 1)
        avg = jnp.where((ri % C) == (ci % C), f32(inv_m), f32(0.0))

        g1_d, be1_d = p_ref[0:1, :], p_ref[1:2, :]
        g2_d, be2_d = p_ref[2:3, :], p_ref[3:4, :]

        # ---- stage x into the H-halo scratch; zero only the two halo rows ----
        zero_row = jnp.zeros((N, 1, WC), f32)
        xh_ref[:, 0:1, :] = zero_row
        xh_ref[:, H + 1:H + 2, :] = zero_row
        xh_ref[:, 1:H + 1, :] = x_ref[...]

        def conv3x3(w_ref):
            # Three accumulated MXU dots (one per ky tap); W-boundary 'SAME'
            # zeros are baked into the banded weight, H-boundary zeros come
            # from the halo rows.  No concat / staging temp.
            acc = jnp.dot(xh_ref[:, 0:H, :].reshape(NH, WC),
                          w_ref[0:WC, :], preferred_element_type=f32)
            acc = acc + jnp.dot(xh_ref[:, 1:H + 1, :].reshape(NH, WC),
                                w_ref[WC:2 * WC, :], preferred_element_type=f32)
            acc = acc + jnp.dot(xh_ref[:, 2:H + 2, :].reshape(NH, WC),
                                w_ref[2 * WC:3 * WC, :],
                                preferred_element_type=f32)
            return acc                                            # (NH, W*C)

        def batchnorm(y, gamma_d, beta_d):
            # Two-pass per-channel batch stats over N*H*W; everything stays on
            # the lane-dense (NH, W*C) view.  `avg` folds+spreads in one dot.
            mean_d = jnp.dot(jnp.sum(y, axis=0, keepdims=True), avg,
                             preferred_element_type=f32)          # (1, W*C)
            cent = y - mean_d
            var_d = jnp.dot(jnp.sum(cent * cent, axis=0, keepdims=True), avg,
                            preferred_element_type=f32)           # (1, W*C)
            return cent * (gamma_d * jax.lax.rsqrt(var_d + EPS)) + beta_d

        # ---- conv1 -> BN1 -> ReLU ----
        h1 = jnp.maximum(batchnorm(conv3x3(w1_ref), g1_d, be1_d), 0.0)

        # ---- conv2 (reuse halo scratch; halo rows still zero) -> BN2 ----
        xh_ref[:, 1:H + 1, :] = h1.reshape(N, H, WC)
        h2 = batchnorm(conv3x3(w2_ref), g2_d, be2_d)

        # ---- residual add (from unpadded x) + ReLU, lane-dense store ----
        out_ref[...] = jnp.maximum(h2.reshape(N, H, WC) + x_ref[...], 0.0)

    x3 = x_nhwc.astype(f32).reshape(N, H, WC)          # lane-dense rows
    band1 = _band_weight(w1.astype(f32), W)
    band2 = _band_weight(w2.astype(f32), W)
    tile_d = lambda v: jnp.tile(v.astype(f32).reshape(1, C), (1, W))  # (1, W*C)
    params = jnp.concatenate(
        [tile_d(g1), tile_d(be1), tile_d(g2), tile_d(be2)], axis=0)   # (4, W*C)

    vspec = pl.BlockSpec(memory_space=pltpu.MemorySpace.VMEM)
    out = pl.pallas_call(
        kernel,
        out_shape=jax.ShapeDtypeStruct((N, H, WC), f32),
        in_specs=[vspec] * 4,
        out_specs=vspec,
        scratch_shapes=[pltpu.VMEM((N, H + 2, WC), f32)],
    )(x3, band1, band2, params)
    return out.reshape(N, H, W, C)


def ref_forward(x_nhwc, w1hwio, b1, g1, be1, w2hwio, b2, g2, be2):
    """Plain-JAX reference (NHWC) for correctness checking (bias included)."""
    def conv(x, w, b):
        y = jax.lax.conv_general_dilated(
            x, w, (1, 1), 'SAME',
            dimension_numbers=('NHWC', 'HWIO', 'NHWC'))
        return y + b

    def bn(x, g, be):
        m = x.mean(axis=(0, 1, 2))
        v = ((x - m) ** 2).mean(axis=(0, 1, 2))
        return (x - m) * jax.lax.rsqrt(v + EPS) * g + be

    h = jnp.maximum(bn(conv(x_nhwc, w1hwio, b1), g1, be1), 0.0)
    h = bn(conv(h, w2hwio, b2), g2, be2)
    return jnp.maximum(h + x_nhwc, 0.0)


if __name__ == "__main__":
    N, C, H, W = 2, 8, 16, 16          # batch, channels (in == out), spatial
    key = jax.random.PRNGKey(0)
    k = jax.random.split(key, 5)

    # PyTorch-style NCHW input
    x_nchw = jax.random.normal(k[0], (N, C, H, W), jnp.float32)

    # Deterministic synthetic parameters (shapes from ResidualBlock.__init__)
    w1 = 0.1 * jax.random.normal(k[1], (3, 3, C, C), jnp.float32)   # conv1 weight (HWIO)
    b1 = 0.1 * jax.random.normal(k[2], (C,), jnp.float32)           # conv1 bias
    g1 = 1.0 + 0.1 * jnp.arange(C, dtype=jnp.float32)               # BN1 gamma
    be1 = 0.05 * jnp.arange(C, dtype=jnp.float32)                   # BN1 beta
    w2 = 0.1 * jax.random.normal(k[3], (3, 3, C, C), jnp.float32)   # conv2 weight
    b2 = 0.1 * jax.random.normal(k[4], (C,), jnp.float32)           # conv2 bias
    g2 = 1.0 - 0.05 * jnp.arange(C, dtype=jnp.float32)              # BN2 gamma
    be2 = -0.03 * jnp.arange(C, dtype=jnp.float32)                  # BN2 beta

    x_nhwc = jnp.transpose(x_nchw, (0, 2, 3, 1))                    # NCHW -> NHWC

    out = residual_block(x_nhwc, w1, b1, g1, be1, w2, b2, g2, be2)
    out = jax.block_until_ready(out)

    ref = ref_forward(x_nhwc, w1, b1, g1, be1, w2, b2, g2, be2)
    err = float(jnp.max(jnp.abs(out - ref)))
    assert jnp.allclose(out, ref, atol=1e-4, rtol=1e-4), f"max abs err {err}"

    out_nchw = jnp.transpose(out, (0, 3, 1, 2))                     # back to PyTorch NCHW
    print("KERNEL_OK")
</pallas_src>

<mosaic_0001>
module attributes {stable_mosaic.version = 11 : i64} {
  func.func @kernel(%arg0: memref<2x16x128xf32, #tpu.memory_space<vmem>>, %arg1: memref<384x128xf32, #tpu.memory_space<vmem>>, %arg2: memref<384x128xf32, #tpu.memory_space<vmem>>, %arg3: memref<4x128xf32, #tpu.memory_space<vmem>>, %arg4: memref<2x16x128xf32, #tpu.memory_space<vmem>>, %arg5: memref<2x18x128xf32, #tpu.memory_space<vmem>>) attributes {dimension_semantics = [], scalar_prefetch = 0 : i64, scratch_operands = 1 : i64, tpu.core_type = #tpu.core_type<tc>} {
    %0 = tpu.iota {dimensions = array<i32: 0>} : vector<128x128xi32>
    %1 = tpu.iota {dimensions = array<i32: 1>} : vector<128x128xi32>
    %c8_i32 = arith.constant 8 : i32
    %c0_i32 = arith.constant 0 : i32
    %2 = arith.cmpi eq, %c8_i32, %c0_i32 : i32
    %c1_i32 = arith.constant 1 : i32
    %3 = arith.select %2, %c1_i32, %c8_i32 : i32
    %4 = vector.broadcast %3 : i32 to vector<128x128xi32>
    %5 = arith.remsi %0, %4 : vector<128x128xi32>
    %c0_i32_0 = arith.constant 0 : i32
    %6 = vector.broadcast %c0_i32_0 : i32 to vector<128x128xi32>
    %7 = arith.cmpi ne, %5, %6 : vector<128x128xi32>
    %c0_i32_1 = arith.constant 0 : i32
    %8 = vector.broadcast %c0_i32_1 : i32 to vector<128x128xi32>
    %9 = arith.cmpi slt, %5, %8 : vector<128x128xi32>
    %c0_i32_2 = arith.constant 0 : i32
    %10 = arith.cmpi slt, %3, %c0_i32_2 : i32
    %11 = vector.broadcast %10 : i1 to vector<128x128xi1>
    %12 = vector.broadcast %11 : vector<128x128xi1> to vector<128x128xi1>
    %13 = arith.xori %9, %12 : vector<128x128xi1>
    %14 = arith.andi %13, %7 : vector<128x128xi1>
    %15 = vector.broadcast %3 : i32 to vector<128x128xi32>
    %16 = arith.addi %5, %15 : vector<128x128xi32>
    %17 = arith.select %14, %16, %5 : vector<128x128xi1>, vector<128x128xi32>
    %c8_i32_3 = arith.constant 8 : i32
    %c0_i32_4 = arith.constant 0 : i32
    %18 = arith.cmpi eq, %c8_i32_3, %c0_i32_4 : i32
    %c1_i32_5 = arith.constant 1 : i32
    %19 = arith.select %18, %c1_i32_5, %c8_i32_3 : i32
    %20 = vector.broadcast %19 : i32 to vector<128x128xi32>
    %21 = arith.remsi %1, %20 : vector<128x128xi32>
    %c0_i32_6 = arith.constant 0 : i32
    %22 = vector.broadcast %c0_i32_6 : i32 to vector<128x128xi32>
    %23 = arith.cmpi ne, %21, %22 : vector<128x128xi32>
    %c0_i32_7 = arith.constant 0 : i32
    %24 = vector.broadcast %c0_i32_7 : i32 to vector<128x128xi32>
    %25 = arith.cmpi slt, %21, %24 : vector<128x128xi32>
    %c0_i32_8 = arith.constant 0 : i32
    %26 = arith.cmpi slt, %19, %c0_i32_8 : i32
    %27 = vector.broadcast %26 : i1 to vector<128x128xi1>
    %28 = vector.broadcast %27 : vector<128x128xi1> to vector<128x128xi1>
    %29 = arith.xori %25, %28 : vector<128x128xi1>
    %30 = arith.andi %29, %23 : vector<128x128xi1>
    %31 = vector.broadcast %19 : i32 to vector<128x128xi32>
    %32 = arith.addi %21, %31 : vector<128x128xi32>
    %33 = arith.select %30, %32, %21 : vector<128x128xi1>, vector<128x128xi32>
    %34 = arith.cmpi eq, %17, %33 : vector<128x128xi32>
    %cst = arith.constant 0.001953125 : f32
    %cst_9 = arith.constant 0.000000e+00 : f32
    %35 = vector.broadcast %cst : f32 to vector<128x128xf32>
    %36 = vector.broadcast %cst_9 : f32 to vector<128x128xf32>
    %37 = arith.select %34, %35, %36 : vector<128x128xi1>, vector<128x128xf32>
    %c0 = arith.constant 0 : index
    %c0_10 = arith.constant 0 : index
    %38 = vector.load %arg3[%c0, %c0_10] : memref<4x128xf32, #tpu.memory_space<vmem>>, vector<1x128xf32>
    %c1 = arith.constant 1 : index
    %c0_11 = arith.constant 0 : index
    %39 = vector.load %arg3[%c1, %c0_11] : memref<4x128xf32, #tpu.memory_space<vmem>>, vector<1x128xf32>
    %c2 = arith.constant 2 : index
    %c0_12 = arith.constant 0 : index
    %40 = vector.load %arg3[%c2, %c0_12] : memref<4x128xf32, #tpu.memory_space<vmem>>, vector<1x128xf32>
    %c3 = arith.constant 3 : index
    %c0_13 = arith.constant 0 : index
    %41 = vector.load %arg3[%c3, %c0_13] : memref<4x128xf32, #tpu.memory_space<vmem>>, vector<1x128xf32>
    %cst_14 = arith.constant 0.000000e+00 : f32
    %42 = vector.broadcast %cst_14 : f32 to vector<2x1x128xf32>
    %c0_15 = arith.constant 0 : index
    %c0_16 = arith.constant 0 : index
    %c0_17 = arith.constant 0 : index
    %43 = vector.load %arg5[%c0_15, %c0_16, %c0_17] : memref<2x18x128xf32, #tpu.memory_space<vmem>>, vector<2x1x128xf32>
    tpu.vector_store %arg5[%c0_15, %c0_16, %c0_17], %42 {strides = array<i32>} : memref<2x18x128xf32, #tpu.memory_space<vmem>>, vector<2x1x128xf32>,
    %c0_18 = arith.constant 0 : index
    %c17 = arith.constant 17 : index
    %c0_19 = arith.constant 0 : index
    %44 = vector.load %arg5[%c0_18, %c17, %c0_19] : memref<2x18x128xf32, #tpu.memory_space<vmem>>, vector<2x1x128xf32>
    tpu.vector_store %arg5[%c0_18, %c17, %c0_19], %42 {strides = array<i32>} : memref<2x18x128xf32, #tpu.memory_space<vmem>>, vector<2x1x128xf32>,
    %c0_20 = arith.constant 0 : index
    %c0_21 = arith.constant 0 : index
    %c0_22 = arith.constant 0 : index
    %45 = vector.load %arg0[%c0_20, %c0_21, %c0_22] : memref<2x16x128xf32, #tpu.memory_space<vmem>>, vector<2x16x128xf32>
    %c0_23 = arith.constant 0 : index
    %c1_24 = arith.constant 1 : index
    %c0_25 = arith.constant 0 : index
    %46 = vector.load %arg5[%c0_23, %c1_24, %c0_25] : memref<2x18x128xf32, #tpu.memory_space<vmem>>, vector<2x16x128xf32>
    tpu.vector_store %arg5[%c0_23, %c1_24, %c0_25], %45 {strides = array<i32>} : memref<2x18x128xf32, #tpu.memory_space<vmem>>, vector<2x16x128xf32>,
    %c0_26 = arith.constant 0 : index
    %c0_27 = arith.constant 0 : index
    %c0_28 = arith.constant 0 : index
    %47 = vector.load %arg5[%c0_26, %c0_27, %c0_28] : memref<2x18x128xf32, #tpu.memory_space<vmem>>, vector<2x16x128xf32>
    %48 = vector.shape_cast %47 : vector<2x16x128xf32> to vector<32x128xf32>
    %c0_29 = arith.constant 0 : index
    %c0_30 = arith.constant 0 : index
    %49 = vector.load %arg1[%c0_29, %c0_30] : memref<384x128xf32, #tpu.memory_space<vmem>>, vector<128x128xf32>
    %cst_31 = arith.constant dense<0.000000e+00> : vector<32x128xf32>
    %50 = tpu.matmul %48, %49, %cst_31 {dimension_numbers = #tpu.dot_dimension_numbers<[1], [0], [0], [1], [0, 0, 1, 1], [], []>} : vector<32x128xf32>, vector<128x128xf32>, vector<32x128xf32> -> vector<32x128xf32>
    %c0_32 = arith.constant 0 : index
    %c1_33 = arith.constant 1 : index
    %c0_34 = arith.constant 0 : index
    %51 = vector.load %arg5[%c0_32, %c1_33, %c0_34] : memref<2x18x128xf32, #tpu.memory_space<vmem>>, vector<2x16x128xf32>
    %52 = vector.shape_cast %51 : vector<2x16x128xf32> to vector<32x128xf32>
    %c128 = arith.constant 128 : index
    %c0_35 = arith.constant 0 : index
    %53 = vector.load %arg1[%c128, %c0_35] : memref<384x128xf32, #tpu.memory_space<vmem>>, vector<128x128xf32>
    %cst_36 = arith.constant dense<0.000000e+00> : vector<32x128xf32>
    %54 = tpu.matmul %52, %53, %cst_36 {dimension_numbers = #tpu.dot_dimension_numbers<[1], [0], [0], [1], [0, 0, 1, 1], [], []>} : vector<32x128xf32>, vector<128x128xf32>, vector<32x128xf32> -> vector<32x128xf32>
    %55 = arith.addf %50, %54 : vector<32x128xf32>
    %c0_37 = arith.constant 0 : index
    %c2_38 = arith.constant 2 : index
    %c0_39 = arith.constant 0 : index
    %56 = vector.load %arg5[%c0_37, %c2_38, %c0_39] : memref<2x18x128xf32, #tpu.memory_space<vmem>>, vector<2x16x128xf32>
    %57 = vector.shape_cast %56 : vector<2x16x128xf32> to vector<32x128xf32>
    %c256 = arith.constant 256 : index
    %c0_40 = arith.constant 0 : index
    %58 = vector.load %arg1[%c256, %c0_40] : memref<384x128xf32, #tpu.memory_space<vmem>>, vector<128x128xf32>
    %cst_41 = arith.constant dense<0.000000e+00> : vector<32x128xf32>
    %59 = tpu.matmul %57, %58, %cst_41 {dimension_numbers = #tpu.dot_dimension_numbers<[1], [0], [0], [1], [0, 0, 1, 1], [], []>} : vector<32x128xf32>, vector<128x128xf32>, vector<32x128xf32> -> vector<32x128xf32>
    %60 = arith.addf %55, %59 : vector<32x128xf32>
    %cst_42 = arith.constant dense<0.000000e+00> : vector<128xf32>
    %61 = vector.multi_reduction <add>, %60, %cst_42 [0] : vector<32x128xf32> to vector<128xf32>
    %62 = vector.shape_cast %61 : vector<128xf32> to vector<1x128xf32>
    %cst_43 = arith.constant dense<0.000000e+00> : vector<1x128xf32>
    %63 = tpu.matmul %62, %37, %cst_43 {dimension_numbers = #tpu.dot_dimension_numbers<[1], [0], [0], [1], [0, 0, 1, 1], [], []>} : vector<1x128xf32>, vector<128x128xf32>, vector<1x128xf32> -> vector<1x128xf32>
    %64 = vector.broadcast %63 : vector<1x128xf32> to vector<32x128xf32>
    %65 = arith.subf %60, %64 : vector<32x128xf32>
    %66 = arith.mulf %65, %65 : vector<32x128xf32>
    %cst_44 = arith.constant dense<0.000000e+00> : vector<128xf32>
    %67 = vector.multi_reduction <add>, %66, %cst_44 [0] : vector<32x128xf32> to vector<128xf32>
    %68 = vector.shape_cast %67 : vector<128xf32> to vector<1x128xf32>
    %cst_45 = arith.constant dense<0.000000e+00> : vector<1x128xf32>
    %69 = tpu.matmul %68, %37, %cst_45 {dimension_numbers = #tpu.dot_dimension_numbers<[1], [0], [0], [1], [0, 0, 1, 1], [], []>} : vector<1x128xf32>, vector<128x128xf32>, vector<1x128xf32> -> vector<1x128xf32>
    %cst_46 = arith.constant 9.99999974E-6 : f32
    %70 = vector.broadcast %cst_46 : f32 to vector<1x128xf32>
    %71 = arith.addf %69, %70 : vector<1x128xf32>
    %72 = math.rsqrt %71 : vector<1x128xf32>
    %73 = arith.mulf %38, %72 : vector<1x128xf32>
    %74 = vector.broadcast %73 : vector<1x128xf32> to vector<32x128xf32>
    %75 = arith.mulf %65, %74 : vector<32x128xf32>
    %76 = vector.broadcast %39 : vector<1x128xf32> to vector<32x128xf32>
    %77 = arith.addf %75, %76 : vector<32x128xf32>
    %cst_47 = arith.constant 0.000000e+00 : f32
    %78 = vector.broadcast %cst_47 : f32 to vector<32x128xf32>
    %79 = arith.maximumf %77, %78 : vector<32x128xf32>
    %80 = vector.shape_cast %79 : vector<32x128xf32> to vector<2x16x128xf32>
    %c0_48 = arith.constant 0 : index
    %c1_49 = arith.constant 1 : index
    %c0_50 = arith.constant 0 : index
    %81 = vector.load %arg5[%c0_48, %c1_49, %c0_50] : memref<2x18x128xf32, #tpu.memory_space<vmem>>, vector<2x16x128xf32>
    tpu.vector_store %arg5[%c0_48, %c1_49, %c0_50], %80 {strides = array<i32>} : memref<2x18x128xf32, #tpu.memory_space<vmem>>, vector<2x16x128xf32>,
    %c0_51 = arith.constant 0 : index
    %c0_52 = arith.constant 0 : index
    %c0_53 = arith.constant 0 : index
    %82 = vector.load %arg5[%c0_51, %c0_52, %c0_53] : memref<2x18x128xf32, #tpu.memory_space<vmem>>, vector<2x16x128xf32>
    %83 = vector.shape_cast %82 : vector<2x16x128xf32> to vector<32x128xf32>
    %c0_54 = arith.constant 0 : index
    %c0_55 = arith.constant 0 : index
    %84 = vector.load %arg2[%c0_54, %c0_55] : memref<384x128xf32, #tpu.memory_space<vmem>>, vector<128x128xf32>
    %cst_56 = arith.constant dense<0.000000e+00> : vector<32x128xf32>
    %85 = tpu.matmul %83, %84, %cst_56 {dimension_numbers = #tpu.dot_dimension_numbers<[1], [0], [0], [1], [0, 0, 1, 1], [], []>} : vector<32x128xf32>, vector<128x128xf32>, vector<32x128xf32> -> vector<32x128xf32>
    %c0_57 = arith.constant 0 : index
    %c1_58 = arith.constant 1 : index
    %c0_59 = arith.constant 0 : index
    %86 = vector.load %arg5[%c0_57, %c1_58, %c0_59] : memref<2x18x128xf32, #tpu.memory_space<vmem>>, vector<2x16x128xf32>
    %87 = vector.shape_cast %86 : vector<2x16x128xf32> to vector<32x128xf32>
    %c128_60 = arith.constant 128 : index
    %c0_61 = arith.constant 0 : index
    %88 = vector.load %arg2[%c128_60, %c0_61] : memref<384x128xf32, #tpu.memory_space<vmem>>, vector<128x128xf32>
    %cst_62 = arith.constant dense<0.000000e+00> : vector<32x128xf32>
    %89 = tpu.matmul %87, %88, %cst_62 {dimension_numbers = #tpu.dot_dimension_numbers<[1], [0], [0], [1], [0, 0, 1, 1], [], []>} : vector<32x128xf32>, vector<128x128xf32>, vector<32x128xf32> -> vector<32x128xf32>
    %90 = arith.addf %85, %89 : vector<32x128xf32>
    %c0_63 = arith.constant 0 : index
    %c2_64 = arith.constant 2 : index
    %c0_65 = arith.constant 0 : index
    %91 = vector.load %arg5[%c0_63, %c2_64, %c0_65] : memref<2x18x128xf32, #tpu.memory_space<vmem>>, vector<2x16x128xf32>
    %92 = vector.shape_cast %91 : vector<2x16x128xf32> to vector<32x128xf32>
    %c256_66 = arith.constant 256 : index
    %c0_67 = arith.constant 0 : index
    %93 = vector.load %arg2[%c256_66, %c0_67] : memref<384x128xf32, #tpu.memory_space<vmem>>, vector<128x128xf32>
    %cst_68 = arith.constant dense<0.000000e+00> : vector<32x128xf32>
    %94 = tpu.matmul %92, %93, %cst_68 {dimension_numbers = #tpu.dot_dimension_numbers<[1], [0], [0], [1], [0, 0, 1, 1], [], []>} : vector<32x128xf32>, vector<128x128xf32>, vector<32x128xf32> -> vector<32x128xf32>
    %95 = arith.addf %90, %94 : vector<32x128xf32>
    %cst_69 = arith.constant dense<0.000000e+00> : vector<128xf32>
    %96 = vector.multi_reduction <add>, %95, %cst_69 [0] : vector<32x128xf32> to vector<128xf32>
    %97 = vector.shape_cast %96 : vector<128xf32> to vector<1x128xf32>
    %cst_70 = arith.constant dense<0.000000e+00> : vector<1x128xf32>
    %98 = tpu.matmul %97, %37, %cst_70 {dimension_numbers = #tpu.dot_dimension_numbers<[1], [0], [0], [1], [0, 0, 1, 1], [], []>} : vector<1x128xf32>, vector<128x128xf32>, vector<1x128xf32> -> vector<1x128xf32>
    %99 = vector.broadcast %98 : vector<1x128xf32> to vector<32x128xf32>
    %100 = arith.subf %95, %99 : vector<32x128xf32>
    %101 = arith.mulf %100, %100 : vector<32x128xf32>
    %cst_71 = arith.constant dense<0.000000e+00> : vector<128xf32>
    %102 = vector.multi_reduction <add>, %101, %cst_71 [0] : vector<32x128xf32> to vector<128xf32>
    %103 = vector.shape_cast %102 : vector<128xf32> to vector<1x128xf32>
    %cst_72 = arith.constant dense<0.000000e+00> : vector<1x128xf32>
    %104 = tpu.matmul %103, %37, %cst_72 {dimension_numbers = #tpu.dot_dimension_numbers<[1], [0], [0], [1], [0, 0, 1, 1], [], []>} : vector<1x128xf32>, vector<128x128xf32>, vector<1x128xf32> -> vector<1x128xf32>
    %cst_73 = arith.constant 9.99999974E-6 : f32
    %105 = vector.broadcast %cst_73 : f32 to vector<1x128xf32>
    %106 = arith.addf %104, %105 : vector<1x128xf32>
    %107 = math.rsqrt %106 : vector<1x128xf32>
    %108 = arith.mulf %40, %107 : vector<1x128xf32>
    %109 = vector.broadcast %108 : vector<1x128xf32> to vector<32x128xf32>
    %110 = arith.mulf %100, %109 : vector<32x128xf32>
    %111 = vector.broadcast %41 : vector<1x128xf32> to vector<32x128xf32>
    %112 = arith.addf %110, %111 : vector<32x128xf32>
    %113 = vector.shape_cast %112 : vector<32x128xf32> to vector<2x16x128xf32>
    %c0_74 = arith.constant 0 : index
    %c0_75 = arith.constant 0 : index
    %c0_76 = arith.constant 0 : index
    %114 = vector.load %arg0[%c0_74, %c0_75, %c0_76] : memref<2x16x128xf32, #tpu.memory_space<vmem>>, vector<2x16x128xf32>
    %115 = arith.addf %113, %114 : vector<2x16x128xf32>
    %cst_77 = arith.constant 0.000000e+00 : f32
    %116 = vector.broadcast %cst_77 : f32 to vector<2x16x128xf32>
    %117 = arith.maximumf %115, %116 : vector<2x16x128xf32>
    %c0_78 = arith.constant 0 : index
    %c0_79 = arith.constant 0 : index
    %c0_80 = arith.constant 0 : index
    %118 = vector.load %arg4[%c0_78, %c0_79, %c0_80] : memref<2x16x128xf32, #tpu.memory_space<vmem>>, vector<2x16x128xf32>
    tpu.vector_store %arg4[%c0_78, %c0_79, %c0_80], %117 {strides = array<i32>} : memref<2x16x128xf32, #tpu.memory_space<vmem>>, vector<2x16x128xf32>,
    return
  }
}

</mosaic_0001>

<llo_original>
// kernel: tpu_custom_call.1
$region0: #{tpu_custom_call.1}
  #allocation0 [shape = 'u32[]', space=smem, size = 0x4, offset = 0x4, fixed_abs, tag = 'smem constant byte address 0x4 - core index']
  #allocation1 [shape = 'u32[144,128]{1,0:T(1,128)}', space=vmem, size = 0x12000, scoped, tag = 'internal scratch']
  #allocation2 [shape = 'f32[2,18,128]{2,1,0:T(8,128)}', space=vmem, size = 0x6000, scoped, tag = 'scratch operand']
  %s0 = inlined_call_operand.hbm [shape: f32[2,16,128], index: 0, kind: input, shape index: {}]
  %s1 = inlined_call_operand.hbm [shape: f32[384,128], index: 1, kind: input, shape index: {}]
  %s2 = inlined_call_operand.hbm [shape: f32[384,128], index: 2, kind: input, shape index: {}]
  %s3 = inlined_call_operand.vmem [shape: f32[4,128], index: 3, kind: input, shape index: {}]
  %s4 = inlined_call_operand.hbm [shape: f32[2,16,128], index: 4, kind: output, shape index: {}]
  %s5 = sld [smem:[#allocation0]]
  $region38: #{tpu_custom_call.1} parent=0
    _
  %s7 = ssub.s32 1, %s5
  %s8 = scalar_select 0, %s7, %s5
  $region1: #{tpu_custom_call.1} parent=0
    #allocation3 [shape = 'u8[16384]{0}', space=vmem, size = 0x4000, scoped, tag = 'input window, operand 0, single buffered']
    #allocation4 [shape = 's32[1]{0}', space=sflag, size = 0x4, scoped, tag = 'scoped memory for tpu_custom_call.1']
    #allocation5 [shape = 's32[1]{0}', space=sflag, size = 0x4, scoped, tag = 'scoped memory for tpu_custom_call.1']
    #allocation6 [shape = 'u8[196608]{0}', space=vmem, size = 0x30000, scoped, tag = 'input window, operand 1, single buffered']
    #allocation7 [shape = 's32[1]{0}', space=sflag, size = 0x4, scoped, tag = 'scoped memory for tpu_custom_call.1']
    #allocation8 [shape = 'u8[196608]{0}', space=vmem, size = 0x30000, scoped, tag = 'input window, operand 2, single buffered']
    #allocation9 [shape = 'u8[16384]{0}', space=vmem, size = 0x4000, scoped, tag = 'output window, operand 0, single buffered']
    %9 = vsyncpa [#allocation4], 0
    %10 = vsyncpa [#allocation7], 0
    %11 = vsyncpa [#allocation5], 0
    // Predicated region
    $region2: #{tpu_custom_call.1} parent=1 // pred_check
      _
    $region3: #{tpu_custom_call.1} parent=1 // pred_check_branch
      %13 = sbr.rel (0) target = $region5
    $region4: #{tpu_custom_call.1} parent=1 // pred_region
      %s15 = ssub.s32 512, 512
      %16 = vsyncadd [#allocation4], %s15
      %s17 = sshll.u32 [#allocation3], 4
      %s18 = int_to_ptr.vmem [resolvable:$true] %s17
      %23 = dma.hbm_to_vmem [thread:$0]  %s0, 512, %s18, [#allocation4], 128, 128, 8
    $region5: #{tpu_custom_call.1} parent=1 // pred_fallthru
      _
    // Predicated region
    $region6: #{tpu_custom_call.1} parent=1 // pred_check
      _
    $region7: #{tpu_custom_call.1} parent=1 // pred_check_branch
      %25 = sbr.rel (0) target = $region9
    $region8: #{tpu_custom_call.1} parent=1 // pred_region
      %s27 = ssub.s32 6144, 6144
      %28 = vsyncadd [#allocation7], %s27
      %s29 = sshll.u32 [#allocation6], 4
      %s30 = int_to_ptr.vmem [resolvable:$true] %s29
      %35 = dma.hbm_to_vmem [thread:$0]  %s1, 6144, %s30, [#allocation7], 128, 128, 8
    $region9: #{tpu_custom_call.1} parent=1 // pred_fallthru
      _
    // Predicated region
    $region10: #{tpu_custom_call.1} parent=1 // pred_check
      _
    $region11: #{tpu_custom_call.1} parent=1 // pred_check_branch
      %37 = sbr.rel (0) target = $region13
    $region12: #{tpu_custom_call.1} parent=1 // pred_region
      %s39 = ssub.s32 6144, 6144
      %40 = vsyncadd [#allocation7], %s39
      %s41 = sshll.u32 [#allocation8], 4
      %s42 = int_to_ptr.vmem [resolvable:$true] %s41
      %47 = dma.hbm_to_vmem [thread:$0]  %s2, 6144, %s42, [#allocation7], 128, 128, 8
    $region13: #{tpu_custom_call.1} parent=1 // pred_fallthru
      _
    // Predicated region
    $region14: #{tpu_custom_call.1} parent=1 // pred_check
      _
    $region15: #{tpu_custom_call.1} parent=1 // pred_check_branch
      %49 = sbr.rel (0) target = $region17
    $region16: #{tpu_custom_call.1} parent=1 // pred_region
      _
    $region17: #{tpu_custom_call.1} parent=1 // pred_fallthru
      _
    // Predicated region
    $region18: #{tpu_custom_call.1} parent=1 // pred_check
      _
    $region19: #{tpu_custom_call.1} parent=1 // pred_check_branch
      %51 = sbr.rel (0) target = $region21
    $region20: #{tpu_custom_call.1} parent=1 // pred_region
      %52 = dma.done [#allocation4], 512
    $region21: #{tpu_custom_call.1} parent=1 // pred_fallthru
      _
    // Predicated region
    $region22: #{tpu_custom_call.1} parent=1 // pred_check
      _
    $region23: #{tpu_custom_call.1} parent=1 // pred_check_branch
      %54 = sbr.rel (0) target = $region25
    $region24: #{tpu_custom_call.1} parent=1 // pred_region
      %55 = dma.done [#allocation7], 6144
    $region25: #{tpu_custom_call.1} parent=1 // pred_fallthru
      _
    // Predicated region
    $region26: #{tpu_custom_call.1} parent=1 // pred_check
      _
    $region27: #{tpu_custom_call.1} parent=1 // pred_check_branch
      %57 = sbr.rel (0) target = $region29
    $region28: #{tpu_custom_call.1} parent=1 // pred_region
      %58 = dma.done [#allocation7], 6144
    $region29: #{tpu_custom_call.1} parent=1 // pred_fallthru
      _
    %v59 = vlaneseq
    %v60 = vshrl.u32 %v59, 7
    %v61 = vadd.s32 %v60, 8
    %v62 = vadd.s32 %v60, 16
    %v63 = vadd.s32 %v60, 24
    %v64 = vadd.s32 %v60, 32
    %v65 = vadd.s32 %v60, 40
    %v66 = vadd.s32 %v60, 48
    %v67 = vadd.s32 %v60, 56
    %v68 = vadd.s32 %v60, 64
    %v69 = vadd.s32 %v60, 72
    %v70 = vadd.s32 %v60, 80
    %v71 = vadd.s32 %v60, 88
    %v72 = vadd.s32 %v60, 96
    %v73 = vadd.s32 %v60, 104
    %v74 = vadd.s32 %v60, 112
    %v75 = vadd.s32 %v60, 120
    %v76 = vlaneseq
    %v77 = vand.u32 %v76, 127
    %vm78 = vcmp.lt.s32.totalorder %v60, 0
    %v79 = vsub.s32 0, %v60
    %v80 = vsel %vm78, %v79, %v60
    %v81 = vshrl.u32 %v80, 3
    %v82 = vand.u32 %v80, 7
    %v83 = vsub.s32 0, %v82
    %v84 = vsel %vm78, %v83, %v82
    %vm85 = vcmp.lt.s32.totalorder %v61, 0
    %v86 = vsub.s32 0, %v61
    %v87 = vsel %vm85, %v86, %v61
    %v88 = vshrl.u32 %v87, 3
    %v89 = vand.u32 %v87, 7
    %v90 = vsub.s32 0, %v89
    %v91 = vsel %vm85, %v90, %v89
    %vm92 = vcmp.lt.s32.totalorder %v62, 0
    %v93 = vsub.s32 0, %v62
    %v94 = vsel %vm92, %v93, %v62
    %v95 = vshrl.u32 %v94, 3
    %v96 = vand.u32 %v94, 7
    %v97 = vsub.s32 0, %v96
    %v98 = vsel %vm92, %v97, %v96
    %vm99 = vcmp.lt.s32.totalorder %v63, 0
    %v100 = vsub.s32 0, %v63
    %v101 = vsel %vm99, %v100, %v63
    %v102 = vshrl.u32 %v101, 3
    %v103 = vand.u32 %v101, 7
    %v104 = vsub.s32 0, %v103
    %v105 = vsel %vm99, %v104, %v103
    %vm106 = vcmp.lt.s32.totalorder %v64, 0
    %v107 = vsub.s32 0, %v64
    %v108 = vsel %vm106, %v107, %v64
    %v109 = vshrl.u32 %v108, 3
    %v110 = vand.u32 %v108, 7
    %v111 = vsub.s32 0, %v110
    %v112 = vsel %vm106, %v111, %v110
    %vm113 = vcmp.lt.s32.totalorder %v65, 0
    %v114 = vsub.s32 0, %v65
    %v115 = vsel %vm113, %v114, %v65
    %v116 = vshrl.u32 %v115, 3
    %v117 = vand.u32 %v115, 7
    %v118 = vsub.s32 0, %v117
    %v119 = vsel %vm113, %v118, %v117
    %vm120 = vcmp.lt.s32.totalorder %v66, 0
    %v121 = vsub.s32 0, %v66
    %v122 = vsel %vm120, %v121, %v66
    %v123 = vshrl.u32 %v122, 3
    %v124 = vand.u32 %v122, 7
    %v125 = vsub.s32 0, %v124
    %v126 = vsel %vm120, %v125, %v124
    %vm127 = vcmp.lt.s32.totalorder %v67, 0
    %v128 = vsub.s32 0, %v67
    %v129 = vsel %vm127, %v128, %v67
    %v130 = vshrl.u32 %v129, 3
    %v131 = vand.u32 %v129, 7
    %v132 = vsub.s32 0, %v131
    %v133 = vsel %vm127, %v132, %v131
    %vm134 = vcmp.lt.s32.totalorder %v68, 0
    %v135 = vsub.s32 0, %v68
    %v136 = vsel %vm134, %v135, %v68
    %v137 = vshrl.u32 %v136, 3
    %v138 = vand.u32 %v136, 7
    %v139 = vsub.s32 0, %v138
    %v140 = vsel %vm134, %v139, %v138
    %vm141 = vcmp.lt.s32.totalorder %v69, 0
    %v142 = vsub.s32 0, %v69
    %v143 = vsel %vm141, %v142, %v69
    %v144 = vshrl.u32 %v143, 3
    %v145 = vand.u32 %v143, 7
    %v146 = vsub.s32 0, %v145
    %v147 = vsel %vm141, %v146, %v145
    %vm148 = vcmp.lt.s32.totalorder %v70, 0
    %v149 = vsub.s32 0, %v70
    %v150 = vsel %vm148, %v149, %v70
    %v151 = vshrl.u32 %v150, 3
    %v152 = vand.u32 %v150, 7
    %v153 = vsub.s32 0, %v152
    %v154 = vsel %vm148, %v153, %v152
    %vm155 = vcmp.lt.s32.totalorder %v71, 0
    %v156 = vsub.s32 0, %v71
    %v157 = vsel %vm155, %v156, %v71
    %v158 = vshrl.u32 %v157, 3
    %v159 = vand.u32 %v157, 7
    %v160 = vsub.s32 0, %v159
    %v161 = vsel %vm155, %v160, %v159
    %vm162 = vcmp.lt.s32.totalorder %v72, 0
    %v163 = vsub.s32 0, %v72
    %v164 = vsel %vm162, %v163, %v72
    %v165 = vshrl.u32 %v164, 3
    %v166 = vand.u32 %v164, 7
    %v167 = vsub.s32 0, %v166
    %v168 = vsel %vm162, %v167, %v166
    %vm169 = vcmp.lt.s32.totalorder %v73, 0
    %v170 = vsub.s32 0, %v73
    %v171 = vsel %vm169, %v170, %v73
    %v172 = vshrl.u32 %v171, 3
    %v173 = vand.u32 %v171, 7
    %v174 = vsub.s32 0, %v173
    %v175 = vsel %vm169, %v174, %v173
    %vm176 = vcmp.lt.s32.totalorder %v74, 0
    %v177 = vsub.s32 0, %v74
    %v178 = vsel %vm176, %v177, %v74
    %v179 = vshrl.u32 %v178, 3
    %v180 = vand.u32 %v178, 7
    %v181 = vsub.s32 0, %v180
    %v182 = vsel %vm176, %v181, %v180
    %vm183 = vcmp.lt.s32.totalorder %v75, 0
    %v184 = vsub.s32 0, %v75
    %v185 = vsel %vm183, %v184, %v75
    %v186 = vshrl.u32 %v185, 3
    %v187 = vand.u32 %v185, 7
    %v188 = vsub.s32 0, %v187
    %v189 = vsel %vm183, %v188, %v187
    %vm190 = vcmp.ne.s32.totalorder %v84, 0
    %vm191 = vcmp.ne.s32.totalorder %v91, 0
    %vm192 = vcmp.ne.s32.totalorder %v98, 0
    %vm193 = vcmp.ne.s32.totalorder %v105, 0
    %vm194 = vcmp.ne.s32.totalorder %v112, 0
    %vm195 = vcmp.ne.s32.totalorder %v119, 0
    %vm196 = vcmp.ne.s32.totalorder %v126, 0
    %vm197 = vcmp.ne.s32.totalorder %v133, 0
    %vm198 = vcmp.ne.s32.totalorder %v140, 0
    %vm199 = vcmp.ne.s32.totalorder %v147, 0
    %vm200 = vcmp.ne.s32.totalorder %v154, 0
    %vm201 = vcmp.ne.s32.totalorder %v161, 0
    %vm202 = vcmp.ne.s32.totalorder %v168, 0
    %vm203 = vcmp.ne.s32.totalorder %v175, 0
    %vm204 = vcmp.ne.s32.totalorder %v182, 0
    %vm205 = vcmp.ne.s32.totalorder %v189, 0
    %vm206 = vcmp.lt.s32.totalorder %v84, 0
    %vm207 = vcmp.lt.s32.totalorder %v91, 0
    %vm208 = vcmp.lt.s32.totalorder %v98, 0
    %vm209 = vcmp.lt.s32.totalorder %v105, 0
    %vm210 = vcmp.lt.s32.totalorder %v112, 0
    %vm211 = vcmp.lt.s32.totalorder %v119, 0
    %vm212 = vcmp.lt.s32.totalorder %v126, 0
    %vm213 = vcmp.lt.s32.totalorder %v133, 0
    %vm214 = vcmp.lt.s32.totalorder %v140, 0
    %vm215 = vcmp.lt.s32.totalorder %v147, 0
    %vm216 = vcmp.lt.s32.totalorder %v154, 0
    %vm217 = vcmp.lt.s32.totalorder %v161, 0
    %vm218 = vcmp.lt.s32.totalorder %v168, 0
    %vm219 = vcmp.lt.s32.totalorder %v175, 0
    %vm220 = vcmp.lt.s32.totalorder %v182, 0
    %vm221 = vcmp.lt.s32.totalorder %v189, 0
    %vm222 = vmand %vm206, %vm190
    %vm223 = vmand %vm207, %vm191
    %vm224 = vmand %vm208, %vm192
    %vm225 = vmand %vm209, %vm193
    %vm226 = vmand %vm210, %vm194
    %vm227 = vmand %vm211, %vm195
    %vm228 = vmand %vm212, %vm196
    %vm229 = vmand %vm213, %vm197
    %vm230 = vmand %vm214, %vm198
    %vm231 = vmand %vm215, %vm199
    %vm232 = vmand %vm216, %vm200
    %vm233 = vmand %vm217, %vm201
    %vm234 = vmand %vm218, %vm202
    %vm235 = vmand %vm219, %vm203
    %vm236 = vmand %vm220, %vm204
    %vm237 = vmand %vm221, %vm205
    %v238 = vadd.s32 %v84, 8
    %v239 = vadd.s32 %v91, 8
    %v240 = vadd.s32 %v98, 8
    %v241 = vadd.s32 %v105, 8
    %v242 = vadd.s32 %v112, 8
    %v243 = vadd.s32 %v119, 8
    %v244 = vadd.s32 %v126, 8
    %v245 = vadd.s32 %v133, 8
    %v246 = vadd.s32 %v140, 8
    %v247 = vadd.s32 %v147, 8
    %v248 = vadd.s32 %v154, 8
    %v249 = vadd.s32 %v161, 8
    %v250 = vadd.s32 %v168, 8
    %v251 = vadd.s32 %v175, 8
    %v252 = vadd.s32 %v182, 8
    %v253 = vadd.s32 %v189, 8
    %v254 = vsel %vm222, %v238, %v84
    %v255 = vsel %vm223, %v239, %v91
    %v256 = vsel %vm224, %v240, %v98
    %v257 = vsel %vm225, %v241, %v105
    %v258 = vsel %vm226, %v242, %v112
    %v259 = vsel %vm227, %v243, %v119
    %v260 = vsel %vm228, %v244, %v126
    %v261 = vsel %vm229, %v245, %v133
    %v262 = vsel %vm230, %v246, %v140
    %v263 = vsel %vm231, %v247, %v147
    %v264 = vsel %vm232, %v248, %v154
    %v265 = vsel %vm233, %v249, %v161
    %v266 = vsel %vm234, %v250, %v168
    %v267 = vsel %vm235, %v251, %v175
    %v268 = vsel %vm236, %v252, %v182
    %v269 = vsel %vm237, %v253, %v189
    %vm270 = vcmp.lt.s32.totalorder %v77, 0
    %v271 = vsub.s32 0, %v77
    %v272 = vsel %vm270, %v271, %v77
    %v273 = vshrl.u32 %v272, 3
    %v274 = vand.u32 %v272, 7
    %v275 = vsub.s32 0, %v274
    %v276 = vsel %vm270, %v275, %v274
    %vm277 = vcmp.ne.s32.totalorder %v276, 0
    %vm278 = vcmp.lt.s32.totalorder %v276, 0
    %vm279 = vmand %vm278, %vm277
    %v280 = vadd.s32 %v276, 8
    %v281 = vsel %vm279, %v280, %v276
    %vm282 = vcmp.eq.s32.totalorder %v254, %v281
    %vm283 = vcmp.eq.s32.totalorder %v255, %v281
    %vm284 = vcmp.eq.s32.totalorder %v256, %v281
    %vm285 = vcmp.eq.s32.totalorder %v257, %v281
    %vm286 = vcmp.eq.s32.totalorder %v258, %v281
    %vm287 = vcmp.eq.s32.totalorder %v259, %v281
    %vm288 = vcmp.eq.s32.totalorder %v260, %v281
    %vm289 = vcmp.eq.s32.totalorder %v261, %v281
    %vm290 = vcmp.eq.s32.totalorder %v262, %v281
    %vm291 = vcmp.eq.s32.totalorder %v263, %v281
    %vm292 = vcmp.eq.s32.totalorder %v264, %v281
    %vm293 = vcmp.eq.s32.totalorder %v265, %v281
    %vm294 = vcmp.eq.s32.totalorder %v266, %v281
    %vm295 = vcmp.eq.s32.totalorder %v267, %v281
    %vm296 = vcmp.eq.s32.totalorder %v268, %v281
    %vm297 = vcmp.eq.s32.totalorder %v269, %v281
    %v298 = vsel %vm282, 0.001953125, 0.0
    %v299 = vsel %vm283, 0.001953125, 0.0
    %v300 = vsel %vm284, 0.001953125, 0.0
    %v301 = vsel %vm285, 0.001953125, 0.0
    %v302 = vsel %vm286, 0.001953125, 0.0
    %v303 = vsel %vm287, 0.001953125, 0.0
    %v304 = vsel %vm288, 0.001953125, 0.0
    %v305 = vsel %vm289, 0.001953125, 0.0
    %v306 = vsel %vm290, 0.001953125, 0.0
    %v307 = vsel %vm291, 0.001953125, 0.0
    %v308 = vsel %vm292, 0.001953125, 0.0
    %v309 = vsel %vm293, 0.001953125, 0.0
    %v310 = vsel %vm294, 0.001953125, 0.0
    %v311 = vsel %vm295, 0.001953125, 0.0
    %v312 = vsel %vm296, 0.001953125, 0.0
    %v313 = vsel %vm297, 0.001953125, 0.0
    %v314 = vld [vmem:[%s3] sm:$0x1]
    %v315 = vld [vmem:[%s3 + $0x1] sm:$0x1]
    %v316 = vld [vmem:[%s3 + $0x2] sm:$0x1]
    %v317 = vld [vmem:[%s3 + $0x3] sm:$0x1]
    %318 = vst [vmem:[#allocation2] sm:$0x1] 0.0
    %319 = vst [vmem:[#allocation2 + $0x18] sm:$0x1] 0.0
    %320 = vst [vmem:[#allocation2 + $0x11] sm:$0x1] 0.0
    %321 = vst [vmem:[#allocation2 + $0x29] sm:$0x1] 0.0
    %v322 = vld [vmem:[#allocation3] sm:$0xff]
    %v323 = vld [vmem:[#allocation3 + $0x8] sm:$0xff]
    %v324 = vld [vmem:[#allocation3 + $0x10] sm:$0xff]
    %v325 = vld [vmem:[#allocation3 + $0x18] sm:$0xff]
    %326 = vst [vmem:[#allocation2 + $0x1] sm:$0xff] %v322
    %327 = vst [vmem:[#allocation2 + $0x9] sm:$0xff] %v323
    %328 = vst [vmem:[#allocation2 + $0x19] sm:$0xff] %v324
    %329 = vst [vmem:[#allocation2 + $0x21] sm:$0xff] %v325
    %v330 = vld [vmem:[#allocation2] sm:$0xff]
    %v331 = vld [vmem:[#allocation2 + $0x8] sm:$0xff]
    %v332 = vld [vmem:[#allocation2 + $0x18] sm:$0xff]
    %v333 = vld [vmem:[#allocation2 + $0x20] sm:$0xff]
    %v334 = vld [vmem:[#allocation6] sm:$0xff]
    %v335 = vld [vmem:[#allocation6 + $0x8] sm:$0xff]
    %v336 = vld [vmem:[#allocation6 + $0x10] sm:$0xff]
    %v337 = vld [vmem:[#allocation6 + $0x18] sm:$0xff]
    %v338 = vld [vmem:[#allocation6 + $0x20] sm:$0xff]
    %v339 = vld [vmem:[#allocation6 + $0x28] sm:$0xff]
    %v340 = vld [vmem:[#allocation6 + $0x30] sm:$0xff]
    %v341 = vld [vmem:[#allocation6 + $0x38] sm:$0xff]
    %v342 = vld [vmem:[#allocation6 + $0x40] sm:$0xff]
    %v343 = vld [vmem:[#allocation6 + $0x48] sm:$0xff]
    %v344 = vld [vmem:[#allocation6 + $0x50] sm:$0xff]
    %v345 = vld [vmem:[#allocation6 + $0x58] sm:$0xff]
    %v346 = vld [vmem:[#allocation6 + $0x60] sm:$0xff]
    %v347 = vld [vmem:[#allocation6 + $0x68] sm:$0xff]
    %v348 = vld [vmem:[#allocation6 + $0x70] sm:$0xff]
    %v349 = vld [vmem:[#allocation6 + $0x78] sm:$0xff]
    %v350 = vld [vmem:[#allocation2 + $0x1] sm:$0xff]
    %v351 = vld [vmem:[#allocation2 + $0x9] sm:$0xff]
    %v352 = vld [vmem:[#allocation2 + $0x19] sm:$0xff]
    %v353 = vld [vmem:[#allocation2 + $0x21] sm:$0xff]
    %v354 = vld [vmem:[#allocation6 + $0x80] sm:$0xff]
    %v355 = vld [vmem:[#allocation6 + $0x88] sm:$0xff]
    %v356 = vld [vmem:[#allocation6 + $0x90] sm:$0xff]
    %v357 = vld [vmem:[#allocation6 + $0x98] sm:$0xff]
    %v358 = vld [vmem:[#allocation6 + $0xa0] sm:$0xff]
    %v359 = vld [vmem:[#allocation6 + $0xa8] sm:$0xff]
    %v360 = vld [vmem:[#allocation6 + $0xb0] sm:$0xff]
    %v361 = vld [vmem:[#allocation6 + $0xb8] sm:$0xff]
    %v362 = vld [vmem:[#allocation6 + $0xc0] sm:$0xff]
    %v363 = vld [vmem:[#allocation6 + $0xc8] sm:$0xff]
    %v364 = vld [vmem:[#allocation6 + $0xd0] sm:$0xff]
    %v365 = vld [vmem:[#allocation6 + $0xd8] sm:$0xff]
    %v366 = vld [vmem:[#allocation6 + $0xe0] sm:$0xff]
    %v367 = vld [vmem:[#allocation6 + $0xe8] sm:$0xff]
    %v368 = vld [vmem:[#allocation6 + $0xf0] sm:$0xff]
    %v369 = vld [vmem:[#allocation6 + $0xf8] sm:$0xff]
    %370 = vmatprep.subr.mxu0 0.0
    %371 = vmatpush1.msra.mxu0 %v354
    %372 = vmatprep.subr.mxu0 0.0
    %373 = vmatpush1.msra.mxu0 %v355
    %374 = vmatprep.subr.mxu0 0.0
    %375 = vmatpush1.msra.mxu0 %v356
    %376 = vmatprep.subr.mxu0 0.0
    %377 = vmatpush1.msra.mxu0 %v357
    %378 = vmatprep.subr.mxu0 0.0
    %379 = vmatpush1.msra.mxu0 %v358
    %380 = vmatprep.subr.mxu0 0.0
    %381 = vmatpush1.msra.mxu0 %v359
    %382 = vmatprep.subr.mxu0 0.0
    %383 = vmatpush1.msra.mxu0 %v360
    %384 = vmatprep.subr.mxu0 0.0
    %385 = vmatpush1.msra.mxu0 %v361
    %386 = vmatprep.subr.mxu0 0.0
    %387 = vmatpush1.msra.mxu0 %v362
    %388 = vmatprep.subr.mxu0 0.0
    %389 = vmatpush1.msra.mxu0 %v363
    %390 = vmatprep.subr.mxu0 0.0
    %391 = vmatpush1.msra.mxu0 %v364
    %392 = vmatprep.subr.mxu0 0.0
    %393 = vmatpush1.msra.mxu0 %v365
    %394 = vmatprep.subr.mxu0 0.0
    %395 = vmatpush1.msra.mxu0 %v366
    %396 = vmatprep.subr.mxu0 0.0
    %397 = vmatpush1.msra.mxu0 %v367
    %398 = vmatprep.subr.mxu0 0.0
    %399 = vmatpush1.msra.mxu0 %v368
    %400 = vmatprep.subr.mxu0 0.0
    %401 = vmatpush1.msra.mxu0 %v369
    %402 = vmatprep.subr.mxu0 0.0
    %403 = vmatpush1.msra.mxu0 0.0
    %404 = vmatprep.subr.mxu0 0.0
    %405 = vmatpush1.msra.mxu0 0.0
    %406 = vmatprep.subr.mxu0 0.0
    %407 = vmatpush1.msra.mxu0 0.0
    %408 = vmatprep.subr.mxu0 0.0
    %409 = vmatpush1.msra.mxu0 0.0
    %410 = vmatprep.subr.mxu0 0.0
    %411 = vmatpush1.msra.mxu0 0.0
    %412 = vmatprep.subr.mxu0 0.0
    %413 = vmatpush1.msra.mxu0 0.0
    %414 = vmatprep.subr.mxu0 0.0
    %415 = vmatpush1.msra.mxu0 0.0
    %416 = vmatprep.subr.mxu0 0.0
    %417 = vmatpush1.msra.mxu0 0.0
    %418 = vmatprep.subr.mxu0 0.0
    %419 = vmatpush1.msra.mxu0 0.0
    %420 = vmatprep.subr.mxu0 0.0
    %421 = vmatpush1.msra.mxu0 0.0
    %422 = vmatprep.subr.mxu0 0.0
    %423 = vmatpush1.msra.mxu0 0.0
    %424 = vmatprep.subr.mxu0 0.0
    %425 = vmatpush1.msra.mxu0 0.0
    %426 = vmatprep.subr.mxu0 0.0
    %427 = vmatpush1.msra.mxu0 0.0
    %428 = vmatprep.subr.mxu0 0.0
    %429 = vmatpush1.msra.mxu0 0.0
    %430 = vmatprep.subr.mxu0 0.0
    %431 = vmatpush1.msra.mxu0 0.0
    %432 = vmatprep.subr.mxu0 0.0
    %433 = vmatpush1.msra.mxu0 0.0
    %434 = vmatprep.mubr.f32.mxu0 0.0
    %435 = vmatmul.mubr.f32.gmra.mrb[0].mxu0 %v350
    %v436 = vpop.f32.mrb[0].mxu0
    %v437 = vadd.f32 0.0, %v436
    %v438 = vpop.f32.mrb[0].mxu0
    %439 = vmatprep.mubr.f32.mxu0 0.0
    %440 = vmatmul.mubr.f32.gmra.mrb[0].mxu0 %v351
    %v441 = vpop.f32.mrb[0].mxu0
    %v442 = vadd.f32 0.0, %v441
    %v443 = vpop.f32.mrb[0].mxu0
    %444 = vmatprep.mubr.f32.mxu0 0.0
    %445 = vmatmul.mubr.f32.gmra.mrb[0].mxu0 %v352
    %v446 = vpop.f32.mrb[0].mxu0
    %v447 = vadd.f32 0.0, %v446
    %v448 = vpop.f32.mrb[0].mxu0
    %449 = vmatprep.mubr.f32.mxu0 0.0
    %450 = vmatmul.mubr.f32.gmra.mrb[0].mxu0 %v353
    %v451 = vpop.f32.mrb[0].mxu0
    %v452 = vadd.f32 0.0, %v451
    %v453 = vpop.f32.mrb[0].mxu0
    %454 = vdwg.mxu0
    %455 = vmatprep.subr.mxu0 0.0
    %456 = vmatpush1.msra.mxu0 %v334
    %457 = vmatprep.subr.mxu0 0.0
    %458 = vmatpush1.msra.mxu0 %v335
    %459 = vmatprep.subr.mxu0 0.0
    %460 = vmatpush1.msra.mxu0 %v336
    %461 = vmatprep.subr.mxu0 0.0
    %462 = vmatpush1.msra.mxu0 %v337
    %463 = vmatprep.subr.mxu0 0.0
    %464 = vmatpush1.msra.mxu0 %v338
    %465 = vmatprep.subr.mxu0 0.0
    %466 = vmatpush1.msra.mxu0 %v339
    %467 = vmatprep.subr.mxu0 0.0
    %468 = vmatpush1.msra.mxu0 %v340
    %469 = vmatprep.subr.mxu0 0.0
    %470 = vmatpush1.msra.mxu0 %v341
    %471 = vmatprep.subr.mxu0 0.0
    %472 = vmatpush1.msra.mxu0 %v342
    %473 = vmatprep.subr.mxu0 0.0
    %474 = vmatpush1.msra.mxu0 %v343
    %475 = vmatprep.subr.mxu0 0.0
    %476 = vmatpush1.msra.mxu0 %v344
    %477 = vmatprep.subr.mxu0 0.0
    %478 = vmatpush1.msra.mxu0 %v345
    %479 = vmatprep.subr.mxu0 0.0
    %480 = vmatpush1.msra.mxu0 %v346
    %481 = vmatprep.subr.mxu0 0.0
    %482 = vmatpush1.msra.mxu0 %v347
    %483 = vmatprep.subr.mxu0 0.0
    %484 = vmatpush1.msra.mxu0 %v348
    %485 = vmatprep.subr.mxu0 0.0
    %486 = vmatpush1.msra.mxu0 %v349
    %487 = vmatprep.subr.mxu0 0.0
    %488 = vmatpush1.msra.mxu0 0.0
    %489 = vmatprep.subr.mxu0 0.0
    %490 = vmatpush1.msra.mxu0 0.0
    %491 = vmatprep.subr.mxu0 0.0
    %492 = vmatpush1.msra.mxu0 0.0
    %493 = vmatprep.subr.mxu0 0.0
    %494 = vmatpush1.msra.mxu0 0.0
    %495 = vmatprep.subr.mxu0 0.0
    %496 = vmatpush1.msra.mxu0 0.0
    %497 = vmatprep.subr.mxu0 0.0
    %498 = vmatpush1.msra.mxu0 0.0
    %499 = vmatprep.subr.mxu0 0.0
    %500 = vmatpush1.msra.mxu0 0.0
    %501 = vmatprep.subr.mxu0 0.0
    %502 = vmatpush1.msra.mxu0 0.0
    %503 = vmatprep.subr.mxu0 0.0
    %504 = vmatpush1.msra.mxu0 0.0
    %505 = vmatprep.subr.mxu0 0.0
    %506 = vmatpush1.msra.mxu0 0.0
    %507 = vmatprep.subr.mxu0 0.0
    %508 = vmatpush1.msra.mxu0 0.0
    %509 = vmatprep.subr.mxu0 0.0
    %510 = vmatpush1.msra.mxu0 0.0
    %511 = vmatprep.subr.mxu0 0.0
    %512 = vmatpush1.msra.mxu0 0.0
    %513 = vmatprep.subr.mxu0 0.0
    %514 = vmatpush1.msra.mxu0 0.0
    %515 = vmatprep.subr.mxu0 0.0
    %516 = vmatpush1.msra.mxu0 0.0
    %517 = vmatprep.subr.mxu0 0.0
    %518 = vmatpush1.msra.mxu0 0.0
    %519 = vmatprep.mubr.f32.mxu0 0.0
    %520 = vmatmul.mubr.f32.gmra.mrb[0].mxu0 %v330
    %v521 = vpop.f32.mrb[0].mxu0
    %v522 = vadd.f32 %v437, %v521
    %v523 = vpop.f32.mrb[0].mxu0
    %524 = vmatprep.mubr.f32.mxu0 0.0
    %525 = vmatmul.mubr.f32.gmra.mrb[0].mxu0 %v331
    %v526 = vpop.f32.mrb[0].mxu0
    %v527 = vadd.f32 %v442, %v526
    %v528 = vpop.f32.mrb[0].mxu0
    %529 = vmatprep.mubr.f32.mxu0 0.0
    %530 = vmatmul.mubr.f32.gmra.mrb[0].mxu0 %v332
    %v531 = vpop.f32.mrb[0].mxu0
    %v532 = vadd.f32 %v447, %v531
    %v533 = vpop.f32.mrb[0].mxu0
    %534 = vmatprep.mubr.f32.mxu0 0.0
    %535 = vmatmul.mubr.f32.gmra.mrb[0].mxu0 %v333
    %v536 = vpop.f32.mrb[0].mxu0
    %v537 = vadd.f32 %v452, %v536
    %v538 = vpop.f32.mrb[0].mxu0
    %539 = vdwg.mxu0
    %v540 = vld [vmem:[#allocation2 + $0x2] sm:$0xff]
    %v541 = vld [vmem:[#allocation2 + $0xa] sm:$0xff]
    %v542 = vld [vmem:[#allocation2 + $0x1a] sm:$0xff]
    %v543 = vld [vmem:[#allocation2 + $0x22] sm:$0xff]
    %v544 = vld [vmem:[#allocation6 + $0x100] sm:$0xff]
    %v545 = vld [vmem:[#allocation6 + $0x108] sm:$0xff]
    %v546 = vld [vmem:[#allocation6 + $0x110] sm:$0xff]
    %v547 = vld [vmem:[#allocation6 + $0x118] sm:$0xff]
    %v548 = vld [vmem:[#allocation6 + $0x120] sm:$0xff]
    %v549 = vld [vmem:[#allocation6 + $0x128] sm:$0xff]
    %v550 = vld [vmem:[#allocation6 + $0x130] sm:$0xff]
    %v551 = vld [vmem:[#allocation6 + $0x138] sm:$0xff]
    %v552 = vld [vmem:[#allocation6 + $0x140] sm:$0xff]
    %v553 = vld [vmem:[#allocation6 + $0x148] sm:$0xff]
    %v554 = vld [vmem:[#allocation6 + $0x150] sm:$0xff]
    %v555 = vld [vmem:[#allocation6 + $0x158] sm:$0xff]
    %v556 = vld [vmem:[#allocation6 + $0x160] sm:$0xff]
    %v557 = vld [vmem:[#allocation6 + $0x168] sm:$0xff]
    %v558 = vld [vmem:[#allocation6 + $0x170] sm:$0xff]
    %v559 = vld [vmem:[#allocation6 + $0x178] sm:$0xff]
    %560 = vmatprep.subr.mxu0 0.0
    %561 = vmatpush1.msra.mxu0 %v544
    %562 = vmatprep.subr.mxu0 0.0
    %563 = vmatpush1.msra.mxu0 %v545
    %564 = vmatprep.subr.mxu0 0.0
    %565 = vmatpush1.msra.mxu0 %v546
    %566 = vmatprep.subr.mxu0 0.0
    %567 = vmatpush1.msra.mxu0 %v547
    %568 = vmatprep.subr.mxu0 0.0
    %569 = vmatpush1.msra.mxu0 %v548
    %570 = vmatprep.subr.mxu0 0.0
    %571 = vmatpush1.msra.mxu0 %v549
    %572 = vmatprep.subr.mxu0 0.0
    %573 = vmatpush1.msra.mxu0 %v550
    %574 = vmatprep.subr.mxu0 0.0
    %575 = vmatpush1.msra.mxu0 %v551
    %576 = vmatprep.subr.mxu0 0.0
    %577 = vmatpush1.msra.mxu0 %v552
    %578 = vmatprep.subr.mxu0 0.0
    %579 = vmatpush1.msra.mxu0 %v553
    %580 = vmatprep.subr.mxu0 0.0
    %581 = vmatpush1.msra.mxu0 %v554
    %582 = vmatprep.subr.mxu0 0.0
    %583 = vmatpush1.msra.mxu0 %v555
    %584 = vmatprep.subr.mxu0 0.0
    %585 = vmatpush1.msra.mxu0 %v556
    %586 = vmatprep.subr.mxu0 0.0
    %587 = vmatpush1.msra.mxu0 %v557
    %588 = vmatprep.subr.mxu0 0.0
    %589 = vmatpush1.msra.mxu0 %v558
    %590 = vmatprep.subr.mxu0 0.0
    %591 = vmatpush1.msra.mxu0 %v559
    %592 = vmatprep.subr.mxu0 0.0
    %593 = vmatpush1.msra.mxu0 0.0
    %594 = vmatprep.subr.mxu0 0.0
    %595 = vmatpush1.msra.mxu0 0.0
    %596 = vmatprep.subr.mxu0 0.0
    %597 = vmatpush1.msra.mxu0 0.0
    %598 = vmatprep.subr.mxu0 0.0
    %599 = vmatpush1.msra.mxu0 0.0
    %600 = vmatprep.subr.mxu0 0.0
    %601 = vmatpush1.msra.mxu0 0.0
    %602 = vmatprep.subr.mxu0 0.0
    %603 = vmatpush1.msra.mxu0 0.0
    %604 = vmatprep.subr.mxu0 0.0
    %605 = vmatpush1.msra.mxu0 0.0
    %606 = vmatprep.subr.mxu0 0.0
    %607 = vmatpush1.msra.mxu0 0.0
    %608 = vmatprep.subr.mxu0 0.0
    %609 = vmatpush1.msra.mxu0 0.0
    %610 = vmatprep.subr.mxu0 0.0
    %611 = vmatpush1.msra.mxu0 0.0
    %612 = vmatprep.subr.mxu0 0.0
    %613 = vmatpush1.msra.mxu0 0.0
    %614 = vmatprep.subr.mxu0 0.0
    %615 = vmatpush1.msra.mxu0 0.0
    %616 = vmatprep.subr.mxu0 0.0
    %617 = vmatpush1.msra.mxu0 0.0
    %618 = vmatprep.subr.mxu0 0.0
    %619 = vmatpush1.msra.mxu0 0.0
    %620 = vmatprep.subr.mxu0 0.0
    %621 = vmatpush1.msra.mxu0 0.0
    %622 = vmatprep.subr.mxu0 0.0
    %623 = vmatpush1.msra.mxu0 0.0
    %624 = vmatprep.mubr.f32.mxu0 0.0
    %625 = vmatmul.mubr.f32.gmra.mrb[0].mxu0 %v540
    %v626 = vpop.f32.mrb[0].mxu0
    %v627 = vadd.f32 0.0, %v626
    %v628 = vpop.f32.mrb[0].mxu0
    %629 = vmatprep.mubr.f32.mxu0 0.0
    %630 = vmatmul.mubr.f32.gmra.mrb[0].mxu0 %v541
    %v631 = vpop.f32.mrb[0].mxu0
    %v632 = vadd.f32 0.0, %v631
    %v633 = vpop.f32.mrb[0].mxu0
    %634 = vmatprep.mubr.f32.mxu0 0.0
    %635 = vmatmul.mubr.f32.gmra.mrb[0].mxu0 %v542
    %v636 = vpop.f32.mrb[0].mxu0
    %v637 = vadd.f32 0.0, %v636
    %v638 = vpop.f32.mrb[0].mxu0
    %639 = vmatprep.mubr.f32.mxu0 0.0
    %640 = vmatmul.mubr.f32.gmra.mrb[0].mxu0 %v543
    %v641 = vpop.f32.mrb[0].mxu0
    %v642 = vadd.f32 0.0, %v641
    %v643 = vpop.f32.mrb[0].mxu0
    %644 = vdwg.mxu0
    %v645 = vadd.f32 %v522, %v627
    %v646 = vadd.f32 %v527, %v632
    %v647 = vadd.f32 %v532, %v637
    %v648 = vadd.f32 %v537, %v642
    %v649 = vadd.f32 %v645, %v646
    %v650 = vadd.f32 %v649, %v647
    %v651 = vadd.f32 %v650, %v648
    %v652 = vrot.slane %v651, 4
    %v653 = vadd.f32 %v651, %v652
    %v654 = vrot.slane %v653, 2
    %v655 = vadd.f32 %v653, %v654
    %v656 = vrot.slane %v655, 1
    %v657 = vadd.f32 %v655, %v656
    %658 = vmatprep.subr.mxu0 0.0
    %659 = vmatpush1.msra.mxu0 %v298
    %660 = vmatprep.subr.mxu0 0.0
    %661 = vmatpush1.msra.mxu0 %v299
    %662 = vmatprep.subr.mxu0 0.0
    %663 = vmatpush1.msra.mxu0 %v300
    %664 = vmatprep.subr.mxu0 0.0
    %665 = vmatpush1.msra.mxu0 %v301
    %666 = vmatprep.subr.mxu0 0.0
    %667 = vmatpush1.msra.mxu0 %v302
    %668 = vmatprep.subr.mxu0 0.0
    %669 = vmatpush1.msra.mxu0 %v303
    %670 = vmatprep.subr.mxu0 0.0
    %671 = vmatpush1.msra.mxu0 %v304
    %672 = vmatprep.subr.mxu0 0.0
    %673 = vmatpush1.msra.mxu0 %v305
    %674 = vmatprep.subr.mxu0 0.0
    %675 = vmatpush1.msra.mxu0 %v306
    %676 = vmatprep.subr.mxu0 0.0
    %677 = vmatpush1.msra.mxu0 %v307
    %678 = vmatprep.subr.mxu0 0.0
    %679 = vmatpush1.msra.mxu0 %v308
    %680 = vmatprep.subr.mxu0 0.0
    %681 = vmatpush1.msra.mxu0 %v309
    %682 = vmatprep.subr.mxu0 0.0
    %683 = vmatpush1.msra.mxu0 %v310
    %684 = vmatprep.subr.mxu0 0.0
    %685 = vmatpush1.msra.mxu0 %v311
    %686 = vmatprep.subr.mxu0 0.0
    %687 = vmatpush1.msra.mxu0 %v312
    %688 = vmatprep.subr.mxu0 0.0
    %689 = vmatpush1.msra.mxu0 %v313
    %690 = vmatprep.subr.mxu0 0.0
    %691 = vmatpush1.msra.mxu0 0.0
    %692 = vmatprep.subr.mxu0 0.0
    %693 = vmatpush1.msra.mxu0 0.0
    %694 = vmatprep.subr.mxu0 0.0
    %695 = vmatpush1.msra.mxu0 0.0
    %696 = vmatprep.subr.mxu0 0.0
    %697 = vmatpush1.msra.mxu0 0.0
    %698 = vmatprep.subr.mxu0 0.0
    %699 = vmatpush1.msra.mxu0 0.0
    %700 = vmatprep.subr.mxu0 0.0
    %701 = vmatpush1.msra.mxu0 0.0
    %702 = vmatprep.subr.mxu0 0.0
    %703 = vmatpush1.msra.mxu0 0.0
    %704 = vmatprep.subr.mxu0 0.0
    %705 = vmatpush1.msra.mxu0 0.0
    %706 = vmatprep.subr.mxu0 0.0
    %707 = vmatpush1.msra.mxu0 0.0
    %708 = vmatprep.subr.mxu0 0.0
    %709 = vmatpush1.msra.mxu0 0.0
    %710 = vmatprep.subr.mxu0 0.0
    %711 = vmatpush1.msra.mxu0 0.0
    %712 = vmatprep.subr.mxu0 0.0
    %713 = vmatpush1.msra.mxu0 0.0
    %714 = vmatprep.subr.mxu0 0.0
    %715 = vmatpush1.msra.mxu0 0.0
    %716 = vmatprep.subr.mxu0 0.0
    %717 = vmatpush1.msra.mxu0 0.0
    %718 = vmatprep.subr.mxu0 0.0
    %719 = vmatpush1.msra.mxu0 0.0
    %720 = vmatprep.subr.mxu0 0.0
    %721 = vmatpush1.msra.mxu0 0.0
    %722 = vmatprep.mubr.f32.mxu0 0.0
    %723 = vmatmul.mubr.f32.gmra.mrb[0].mxu0 %v657
    %v724 = vpop.f32.mrb[0].mxu0
    %v725 = vadd.f32 0.0, %v724
    %v726 = vpop.f32.mrb[0].mxu0
    %727 = vdwg.mxu0
    %v728 = vlaneseq
    %v729 = vshrl.u32 %v728, 7
    %v730 = vsub.s32 0, %v729
    %v731 = vrot.slane %v725, %v730
    %v732 = vsub.f32 %v645, %v731
    %v733 = vsub.f32 %v646, %v731
    %v734 = vsub.f32 %v647, %v731
    %v735 = vsub.f32 %v648, %v731
    %v736 = vmul.f32 %v732, %v732
    %v737 = vmul.f32 %v733, %v733
    %v738 = vmul.f32 %v734, %v734
    %v739 = vmul.f32 %v735, %v735
    %v740 = vadd.f32 %v736, %v737
    %v741 = vadd.f32 %v740, %v738
    %v742 = vadd.f32 %v741, %v739
    %v743 = vrot.slane %v742, 4
    %v744 = vadd.f32 %v742, %v743
    %v745 = vrot.slane %v744, 2
    %v746 = vadd.f32 %v744, %v745
    %v747 = vrot.slane %v746, 1
    %v748 = vadd.f32 %v746, %v747
    %749 = vmatprep.subr.mxu0 0.0
    %750 = vmatpush1.msra.mxu0 %v298
    %751 = vmatprep.subr.mxu0 0.0
    %752 = vmatpush1.msra.mxu0 %v299
    %753 = vmatprep.subr.mxu0 0.0
    %754 = vmatpush1.msra.mxu0 %v300
    %755 = vmatprep.subr.mxu0 0.0
    %756 = vmatpush1.msra.mxu0 %v301
    %757 = vmatprep.subr.mxu0 0.0
    %758 = vmatpush1.msra.mxu0 %v302
    %759 = vmatprep.subr.mxu0 0.0
    %760 = vmatpush1.msra.mxu0 %v303
    %761 = vmatprep.subr.mxu0 0.0
    %762 = vmatpush1.msra.mxu0 %v304
    %763 = vmatprep.subr.mxu0 0.0
    %764 = vmatpush1.msra.mxu0 %v305
    %765 = vmatprep.subr.mxu0 0.0
    %766 = vmatpush1.msra.mxu0 %v306
    %767 = vmatprep.subr.mxu0 0.0
    %768 = vmatpush1.msra.mxu0 %v307
    %769 = vmatprep.subr.mxu0 0.0
    %770 = vmatpush1.msra.mxu0 %v308
    %771 = vmatprep.subr.mxu0 0.0
    %772 = vmatpush1.msra.mxu0 %v309
    %773 = vmatprep.subr.mxu0 0.0
    %774 = vmatpush1.msra.mxu0 %v310
    %775 = vmatprep.subr.mxu0 0.0
    %776 = vmatpush1.msra.mxu0 %v311
    %777 = vmatprep.subr.mxu0 0.0
    %778 = vmatpush1.msra.mxu0 %v312
    %779 = vmatprep.subr.mxu0 0.0
    %780 = vmatpush1.msra.mxu0 %v313
    %781 = vmatprep.subr.mxu0 0.0
    %782 = vmatpush1.msra.mxu0 0.0
    %783 = vmatprep.subr.mxu0 0.0
    %784 = vmatpush1.msra.mxu0 0.0
    %785 = vmatprep.subr.mxu0 0.0
    %786 = vmatpush1.msra.mxu0 0.0
    %787 = vmatprep.subr.mxu0 0.0
    %788 = vmatpush1.msra.mxu0 0.0
    %789 = vmatprep.subr.mxu0 0.0
    %790 = vmatpush1.msra.mxu0 0.0
    %791 = vmatprep.subr.mxu0 0.0
    %792 = vmatpush1.msra.mxu0 0.0
    %793 = vmatprep.subr.mxu0 0.0
    %794 = vmatpush1.msra.mxu0 0.0
    %795 = vmatprep.subr.mxu0 0.0
    %796 = vmatpush1.msra.mxu0 0.0
    %797 = vmatprep.subr.mxu0 0.0
    %798 = vmatpush1.msra.mxu0 0.0
    %799 = vmatprep.subr.mxu0 0.0
    %800 = vmatpush1.msra.mxu0 0.0
    %801 = vmatprep.subr.mxu0 0.0
    %802 = vmatpush1.msra.mxu0 0.0
    %803 = vmatprep.subr.mxu0 0.0
    %804 = vmatpush1.msra.mxu0 0.0
    %805 = vmatprep.subr.mxu0 0.0
    %806 = vmatpush1.msra.mxu0 0.0
    %807 = vmatprep.subr.mxu0 0.0
    %808 = vmatpush1.msra.mxu0 0.0
    %809 = vmatprep.subr.mxu0 0.0
    %810 = vmatpush1.msra.mxu0 0.0
    %811 = vmatprep.subr.mxu0 0.0
    %812 = vmatpush1.msra.mxu0 0.0
    %813 = vmatprep.mubr.f32.mxu0 0.0
    %814 = vmatmul.mubr.f32.gmra.mrb[0].mxu0 %v748
    %v815 = vpop.f32.mrb[0].mxu0
    %v816 = vadd.f32 1e-05, %v815
    %v817 = vpop.f32.mrb[0].mxu0
    %818 = vdwg.mxu0
    %v819 = vrsqrt.pop %v816
    %v820 = vmul.f32 %v314, %v819
    %v821 = vlaneseq
    %v822 = vshrl.u32 %v821, 7
    %v823 = vsub.s32 0, %v822
    %v824 = vrot.slane %v820, %v823
    %v825 = vmul.f32 %v732, %v824
    %v826 = vmul.f32 %v733, %v824
    %v827 = vmul.f32 %v734, %v824
    %v828 = vmul.f32 %v735, %v824
    %v829 = vlaneseq
    %v830 = vshrl.u32 %v829, 7
    %v831 = vsub.s32 0, %v830
    %v832 = vrot.slane %v315, %v831
    %v833 = vadd.f32 %v825, %v832
    %v834 = vadd.f32 %v826, %v832
    %v835 = vadd.f32 %v827, %v832
    %v836 = vadd.f32 %v828, %v832
    %v837 = vmax.f32 %v833, 0.0
    %v838 = vmax.f32 %v834, 0.0
    %v839 = vmax.f32 %v835, 0.0
    %v840 = vmax.f32 %v836, 0.0
    %841 = vst [vmem:[#allocation2 + $0x1] sm:$0xff] %v837
    %842 = vst [vmem:[#allocation2 + $0x9] sm:$0xff] %v838
    %843 = vst [vmem:[#allocation2 + $0x19] sm:$0xff] %v839
    %844 = vst [vmem:[#allocation2 + $0x21] sm:$0xff] %v840
    %v845 = vld [vmem:[#allocation2] sm:$0xff]
    %v846 = vld [vmem:[#allocation2 + $0x8] sm:$0xff]
    %v847 = vld [vmem:[#allocation2 + $0x18] sm:$0xff]
    %v848 = vld [vmem:[#allocation2 + $0x20] sm:$0xff]
    %v849 = vld [vmem:[#allocation8] sm:$0xff]
    %v850 = vld [vmem:[#allocation8 + $0x8] sm:$0xff]
    %v851 = vld [vmem:[#allocation8 + $0x10] sm:$0xff]
    %v852 = vld [vmem:[#allocation8 + $0x18] sm:$0xff]
    %v853 = vld [vmem:[#allocation8 + $0x20] sm:$0xff]
    %v854 = vld [vmem:[#allocation8 + $0x28] sm:$0xff]
    %v855 = vld [vmem:[#allocation8 + $0x30] sm:$0xff]
    %v856 = vld [vmem:[#allocation8 + $0x38] sm:$0xff]
    %v857 = vld [vmem:[#allocation8 + $0x40] sm:$0xff]
    %v858 = vld [vmem:[#allocation8 + $0x48] sm:$0xff]
    %v859 = vld [vmem:[#allocation8 + $0x50] sm:$0xff]
    %v860 = vld [vmem:[#allocation8 + $0x58] sm:$0xff]
    %v861 = vld [vmem:[#allocation8 + $0x60] sm:$0xff]
    %v862 = vld [vmem:[#allocation8 + $0x68] sm:$0xff]
    %v863 = vld [vmem:[#allocation8 + $0x70] sm:$0xff]
    %v864 = vld [vmem:[#allocation8 + $0x78] sm:$0xff]
    %v865 = vld [vmem:[#allocation2 + $0x1] sm:$0xff]
    %v866 = vld [vmem:[#allocation2 + $0x9] sm:$0xff]
    %v867 = vld [vmem:[#allocation2 + $0x19] sm:$0xff]
    %v868 = vld [vmem:[#allocation2 + $0x21] sm:$0xff]
    %v869 = vld [vmem:[#allocation8 + $0x80] sm:$0xff]
    %v870 = vld [vmem:[#allocation8 + $0x88] sm:$0xff]
    %v871 = vld [vmem:[#allocation8 + $0x90] sm:$0xff]
    %v872 = vld [vmem:[#allocation8 + $0x98] sm:$0xff]
    %v873 = vld [vmem:[#allocation8 + $0xa0] sm:$0xff]
    %v874 = vld [vmem:[#allocation8 + $0xa8] sm:$0xff]
    %v875 = vld [vmem:[#allocation8 + $0xb0] sm:$0xff]
    %v876 = vld [vmem:[#allocation8 + $0xb8] sm:$0xff]
    %v877 = vld [vmem:[#allocation8 + $0xc0] sm:$0xff]
    %v878 = vld [vmem:[#allocation8 + $0xc8] sm:$0xff]
    %v879 = vld [vmem:[#allocation8 + $0xd0] sm:$0xff]
    %v880 = vld [vmem:[#allocation8 + $0xd8] sm:$0xff]
    %v881 = vld [vmem:[#allocation8 + $0xe0] sm:$0xff]
    %v882 = vld [vmem:[#allocation8 + $0xe8] sm:$0xff]
    %v883 = vld [vmem:[#allocation8 + $0xf0] sm:$0xff]
    %v884 = vld [vmem:[#allocation8 + $0xf8] sm:$0xff]
    %885 = vmatprep.subr.mxu0 0.0
    %886 = vmatpush1.msra.mxu0 %v869
    %887 = vmatprep.subr.mxu0 0.0
    %888 = vmatpush1.msra.mxu0 %v870
    %889 = vmatprep.subr.mxu0 0.0
    %890 = vmatpush1.msra.mxu0 %v871
    %891 = vmatprep.subr.mxu0 0.0
    %892 = vmatpush1.msra.mxu0 %v872
    %893 = vmatprep.subr.mxu0 0.0
    %894 = vmatpush1.msra.mxu0 %v873
    %895 = vmatprep.subr.mxu0 0.0
    %896 = vmatpush1.msra.mxu0 %v874
    %897 = vmatprep.subr.mxu0 0.0
    %898 = vmatpush1.msra.mxu0 %v875
    %899 = vmatprep.subr.mxu0 0.0
    %900 = vmatpush1.msra.mxu0 %v876
    %901 = vmatprep.subr.mxu0 0.0
    %902 = vmatpush1.msra.mxu0 %v877
    %903 = vmatprep.subr.mxu0 0.0
    %904 = vmatpush1.msra.mxu0 %v878
    %905 = vmatprep.subr.mxu0 0.0
    %906 = vmatpush1.msra.mxu0 %v879
    %907 = vmatprep.subr.mxu0 0.0
    %908 = vmatpush1.msra.mxu0 %v880
    %909 = vmatprep.subr.mxu0 0.0
    %910 = vmatpush1.msra.mxu0 %v881
    %911 = vmatprep.subr.mxu0 0.0
    %912 = vmatpush1.msra.mxu0 %v882
    %913 = vmatprep.subr.mxu0 0.0
    %914 = vmatpush1.msra.mxu0 %v883
    %915 = vmatprep.subr.mxu0 0.0
    %916 = vmatpush1.msra.mxu0 %v884
    %917 = vmatprep.subr.mxu0 0.0
    %918 = vmatpush1.msra.mxu0 0.0
    %919 = vmatprep.subr.mxu0 0.0
    %920 = vmatpush1.msra.mxu0 0.0
    %921 = vmatprep.subr.mxu0 0.0
    %922 = vmatpush1.msra.mxu0 0.0
    %923 = vmatprep.subr.mxu0 0.0
    %924 = vmatpush1.msra.mxu0 0.0
    %925 = vmatprep.subr.mxu0 0.0
    %926 = vmatpush1.msra.mxu0 0.0
    %927 = vmatprep.subr.mxu0 0.0
    %928 = vmatpush1.msra.mxu0 0.0
    %929 = vmatprep.subr.mxu0 0.0
    %930 = vmatpush1.msra.mxu0 0.0
    %931 = vmatprep.subr.mxu0 0.0
    %932 = vmatpush1.msra.mxu0 0.0
    %933 = vmatprep.subr.mxu0 0.0
    %934 = vmatpush1.msra.mxu0 0.0
    %935 = vmatprep.subr.mxu0 0.0
    %936 = vmatpush1.msra.mxu0 0.0
    %937 = vmatprep.subr.mxu0 0.0
    %938 = vmatpush1.msra.mxu0 0.0
    %939 = vmatprep.subr.mxu0 0.0
    %940 = vmatpush1.msra.mxu0 0.0
    %941 = vmatprep.subr.mxu0 0.0
    %942 = vmatpush1.msra.mxu0 0.0
    %943 = vmatprep.subr.mxu0 0.0
    %944 = vmatpush1.msra.mxu0 0.0
    %945 = vmatprep.subr.mxu0 0.0
    %946 = vmatpush1.msra.mxu0 0.0
    %947 = vmatprep.subr.mxu0 0.0
    %948 = vmatpush1.msra.mxu0 0.0
    %949 = vmatprep.mubr.f32.mxu0 0.0
    %950 = vmatmul.mubr.f32.gmra.mrb[0].mxu0 %v865
    %v951 = vpop.f32.mrb[0].mxu0
    %v952 = vadd.f32 0.0, %v951
    %v953 = vpop.f32.mrb[0].mxu0
    %954 = vmatprep.mubr.f32.mxu0 0.0
    %955 = vmatmul.mubr.f32.gmra.mrb[0].mxu0 %v866
    %v956 = vpop.f32.mrb[0].mxu0
    %v957 = vadd.f32 0.0, %v956
    %v958 = vpop.f32.mrb[0].mxu0
    %959 = vmatprep.mubr.f32.mxu0 0.0
    %960 = vmatmul.mubr.f32.gmra.mrb[0].mxu0 %v867
    %v961 = vpop.f32.mrb[0].mxu0
    %v962 = vadd.f32 0.0, %v961
    %v963 = vpop.f32.mrb[0].mxu0
    %964 = vmatprep.mubr.f32.mxu0 0.0
    %965 = vmatmul.mubr.f32.gmra.mrb[0].mxu0 %v868
    %v966 = vpop.f32.mrb[0].mxu0
    %v967 = vadd.f32 0.0, %v966
    %v968 = vpop.f32.mrb[0].mxu0
    %969 = vdwg.mxu0
    %970 = vmatprep.subr.mxu0 0.0
    %971 = vmatpush1.msra.mxu0 %v849
    %972 = vmatprep.subr.mxu0 0.0
    %973 = vmatpush1.msra.mxu0 %v850
    %974 = vmatprep.subr.mxu0 0.0
    %975 = vmatpush1.msra.mxu0 %v851
    %976 = vmatprep.subr.mxu0 0.0
    %977 = vmatpush1.msra.mxu0 %v852
    %978 = vmatprep.subr.mxu0 0.0
    %979 = vmatpush1.msra.mxu0 %v853
    %980 = vmatprep.subr.mxu0 0.0
    %981 = vmatpush1.msra.mxu0 %v854
    %982 = vmatprep.subr.mxu0 0.0
    %983 = vmatpush1.msra.mxu0 %v855
    %984 = vmatprep.subr.mxu0 0.0
    %985 = vmatpush1.msra.mxu0 %v856
    %986 = vmatprep.subr.mxu0 0.0
    %987 = vmatpush1.msra.mxu0 %v857
    %988 = vmatprep.subr.mxu0 0.0
    %989 = vmatpush1.msra.mxu0 %v858
    %990 = vmatprep.subr.mxu0 0.0
    %991 = vmatpush1.msra.mxu0 %v859
    %992 = vmatprep.subr.mxu0 0.0
    %993 = vmatpush1.msra.mxu0 %v860
    %994 = vmatprep.subr.mxu0 0.0
    %995 = vmatpush1.msra.mxu0 %v861
    %996 = vmatprep.subr.mxu0 0.0
    %997 = vmatpush1.msra.mxu0 %v862
    %998 = vmatprep.subr.mxu0 0.0
    %999 = vmatpush1.msra.mxu0 %v863
    %1000 = vmatprep.subr.mxu0 0.0
    %1001 = vmatpush1.msra.mxu0 %v864
    %1002 = vmatprep.subr.mxu0 0.0
    %1003 = vmatpush1.msra.mxu0 0.0
    %1004 = vmatprep.subr.mxu0 0.0
    %1005 = vmatpush1.msra.mxu0 0.0
    %1006 = vmatprep.subr.mxu0 0.0
    %1007 = vmatpush1.msra.mxu0 0.0
    %1008 = vmatprep.subr.mxu0 0.0
    %1009 = vmatpush1.msra.mxu0 0.0
    %1010 = vmatprep.subr.mxu0 0.0
    %1011 = vmatpush1.msra.mxu0 0.0
    %1012 = vmatprep.subr.mxu0 0.0
    %1013 = vmatpush1.msra.mxu0 0.0
    %1014 = vmatprep.subr.mxu0 0.0
    %1015 = vmatpush1.msra.mxu0 0.0
    %1016 = vmatprep.subr.mxu0 0.0
    %1017 = vmatpush1.msra.mxu0 0.0
    %1018 = vmatprep.subr.mxu0 0.0
    %1019 = vmatpush1.msra.mxu0 0.0
    %1020 = vmatprep.subr.mxu0 0.0
    %1021 = vmatpush1.msra.mxu0 0.0
    %1022 = vmatprep.subr.mxu0 0.0
    %1023 = vmatpush1.msra.mxu0 0.0
    %1024 = vmatprep.subr.mxu0 0.0
    %1025 = vmatpush1.msra.mxu0 0.0
    %1026 = vmatprep.subr.mxu0 0.0
    %1027 = vmatpush1.msra.mxu0 0.0
    %1028 = vmatprep.subr.mxu0 0.0
    %1029 = vmatpush1.msra.mxu0 0.0
    %1030 = vmatprep.subr.mxu0 0.0
    %1031 = vmatpush1.msra.mxu0 0.0
    %1032 = vmatprep.subr.mxu0 0.0
    %1033 = vmatpush1.msra.mxu0 0.0
    %1034 = vmatprep.mubr.f32.mxu0 0.0
    %1035 = vmatmul.mubr.f32.gmra.mrb[0].mxu0 %v845
    %v1036 = vpop.f32.mrb[0].mxu0
    %v1037 = vadd.f32 %v952, %v1036
    %v1038 = vpop.f32.mrb[0].mxu0
    %1039 = vmatprep.mubr.f32.mxu0 0.0
    %1040 = vmatmul.mubr.f32.gmra.mrb[0].mxu0 %v846
    %v1041 = vpop.f32.mrb[0].mxu0
    %v1042 = vadd.f32 %v957, %v1041
    %v1043 = vpop.f32.mrb[0].mxu0
    %1044 = vmatprep.mubr.f32.mxu0 0.0
    %1045 = vmatmul.mubr.f32.gmra.mrb[0].mxu0 %v847
    %v1046 = vpop.f32.mrb[0].mxu0
    %v1047 = vadd.f32 %v962, %v1046
    %v1048 = vpop.f32.mrb[0].mxu0
    %1049 = vmatprep.mubr.f32.mxu0 0.0
    %1050 = vmatmul.mubr.f32.gmra.mrb[0].mxu0 %v848
    %v1051 = vpop.f32.mrb[0].mxu0
    %v1052 = vadd.f32 %v967, %v1051
    %v1053 = vpop.f32.mrb[0].mxu0
    %1054 = vdwg.mxu0
    %v1055 = vld [vmem:[#allocation2 + $0x2] sm:$0xff]
    %v1056 = vld [vmem:[#allocation2 + $0xa] sm:$0xff]
    %v1057 = vld [vmem:[#allocation2 + $0x1a] sm:$0xff]
    %v1058 = vld [vmem:[#allocation2 + $0x22] sm:$0xff]
    %v1059 = vld [vmem:[#allocation8 + $0x100] sm:$0xff]
    %v1060 = vld [vmem:[#allocation8 + $0x108] sm:$0xff]
    %v1061 = vld [vmem:[#allocation8 + $0x110] sm:$0xff]
    %v1062 = vld [vmem:[#allocation8 + $0x118] sm:$0xff]
    %v1063 = vld [vmem:[#allocation8 + $0x120] sm:$0xff]
    %v1064 = vld [vmem:[#allocation8 + $0x128] sm:$0xff]
    %v1065 = vld [vmem:[#allocation8 + $0x130] sm:$0xff]
    %v1066 = vld [vmem:[#allocation8 + $0x138] sm:$0xff]
    %v1067 = vld [vmem:[#allocation8 + $0x140] sm:$0xff]
    %v1068 = vld [vmem:[#allocation8 + $0x148] sm:$0xff]
    %v1069 = vld [vmem:[#allocation8 + $0x150] sm:$0xff]
    %v1070 = vld [vmem:[#allocation8 + $0x158] sm:$0xff]
    %v1071 = vld [vmem:[#allocation8 + $0x160] sm:$0xff]
    %v1072 = vld [vmem:[#allocation8 + $0x168] sm:$0xff]
    %v1073 = vld [vmem:[#allocation8 + $0x170] sm:$0xff]
    %v1074 = vld [vmem:[#allocation8 + $0x178] sm:$0xff]
    %1075 = vmatprep.subr.mxu0 0.0
    %1076 = vmatpush1.msra.mxu0 %v1059
    %1077 = vmatprep.subr.mxu0 0.0
    %1078 = vmatpush1.msra.mxu0 %v1060
    %1079 = vmatprep.subr.mxu0 0.0
    %1080 = vmatpush1.msra.mxu0 %v1061
    %1081 = vmatprep.subr.mxu0 0.0
    %1082 = vmatpush1.msra.mxu0 %v1062
    %1083 = vmatprep.subr.mxu0 0.0
    %1084 = vmatpush1.msra.mxu0 %v1063
    %1085 = vmatprep.subr.mxu0 0.0
    %1086 = vmatpush1.msra.mxu0 %v1064
    %1087 = vmatprep.subr.mxu0 0.0
    %1088 = vmatpush1.msra.mxu0 %v1065
    %1089 = vmatprep.subr.mxu0 0.0
    %1090 = vmatpush1.msra.mxu0 %v1066
    %1091 = vmatprep.subr.mxu0 0.0
    %1092 = vmatpush1.msra.mxu0 %v1067
    %1093 = vmatprep.subr.mxu0 0.0
    %1094 = vmatpush1.msra.mxu0 %v1068
    %1095 = vmatprep.subr.mxu0 0.0
    %1096 = vmatpush1.msra.mxu0 %v1069
    %1097 = vmatprep.subr.mxu0 0.0
    %1098 = vmatpush1.msra.mxu0 %v1070
    %1099 = vmatprep.subr.mxu0 0.0
    %1100 = vmatpush1.msra.mxu0 %v1071
    %1101 = vmatprep.subr.mxu0 0.0
    %1102 = vmatpush1.msra.mxu0 %v1072
    %1103 = vmatprep.subr.mxu0 0.0
    %1104 = vmatpush1.msra.mxu0 %v1073
    %1105 = vmatprep.subr.mxu0 0.0
    %1106 = vmatpush1.msra.mxu0 %v1074
    %1107 = vmatprep.subr.mxu0 0.0
    %1108 = vmatpush1.msra.mxu0 0.0
    %1109 = vmatprep.subr.mxu0 0.0
    %1110 = vmatpush1.msra.mxu0 0.0
    %1111 = vmatprep.subr.mxu0 0.0
    %1112 = vmatpush1.msra.mxu0 0.0
    %1113 = vmatprep.subr.mxu0 0.0
    %1114 = vmatpush1.msra.mxu0 0.0
    %1115 = vmatprep.subr.mxu0 0.0
    %1116 = vmatpush1.msra.mxu0 0.0
    %1117 = vmatprep.subr.mxu0 0.0
    %1118 = vmatpush1.msra.mxu0 0.0
    %1119 = vmatprep.subr.mxu0 0.0
    %1120 = vmatpush1.msra.mxu0 0.0
    %1121 = vmatprep.subr.mxu0 0.0
    %1122 = vmatpush1.msra.mxu0 0.0
    %1123 = vmatprep.subr.mxu0 0.0
    %1124 = vmatpush1.msra.mxu0 0.0
    %1125 = vmatprep.subr.mxu0 0.0
    %1126 = vmatpush1.msra.mxu0 0.0
    %1127 = vmatprep.subr.mxu0 0.0
    %1128 = vmatpush1.msra.mxu0 0.0
    %1129 = vmatprep.subr.mxu0 0.0
    %1130 = vmatpush1.msra.mxu0 0.0
    %1131 = vmatprep.subr.mxu0 0.0
    %1132 = vmatpush1.msra.mxu0 0.0
    %1133 = vmatprep.subr.mxu0 0.0
    %1134 = vmatpush1.msra.mxu0 0.0
    %1135 = vmatprep.subr.mxu0 0.0
    %1136 = vmatpush1.msra.mxu0 0.0
    %1137 = vmatprep.subr.mxu0 0.0
    %1138 = vmatpush1.msra.mxu0 0.0
    %1139 = vmatprep.mubr.f32.mxu0 0.0
    %1140 = vmatmul.mubr.f32.gmra.mrb[0].mxu0 %v1055
    %v1141 = vpop.f32.mrb[0].mxu0
    %v1142 = vadd.f32 0.0, %v1141
    %v1143 = vpop.f32.mrb[0].mxu0
    %1144 = vmatprep.mubr.f32.mxu0 0.0
    %1145 = vmatmul.mubr.f32.gmra.mrb[0].mxu0 %v1056
    %v1146 = vpop.f32.mrb[0].mxu0
    %v1147 = vadd.f32 0.0, %v1146
    %v1148 = vpop.f32.mrb[0].mxu0
    %1149 = vmatprep.mubr.f32.mxu0 0.0
    %1150 = vmatmul.mubr.f32.gmra.mrb[0].mxu0 %v1057
    %v1151 = vpop.f32.mrb[0].mxu0
    %v1152 = vadd.f32 0.0, %v1151
    %v1153 = vpop.f32.mrb[0].mxu0
    %1154 = vmatprep.mubr.f32.mxu0 0.0
    %1155 = vmatmul.mubr.f32.gmra.mrb[0].mxu0 %v1058
    %v1156 = vpop.f32.mrb[0].mxu0
    %v1157 = vadd.f32 0.0, %v1156
    %v1158 = vpop.f32.mrb[0].mxu0
    %1159 = vdwg.mxu0
    %v1160 = vadd.f32 %v1037, %v1142
    %v1161 = vadd.f32 %v1042, %v1147
    %v1162 = vadd.f32 %v1047, %v1152
    %v1163 = vadd.f32 %v1052, %v1157
    %v1164 = vadd.f32 %v1160, %v1161
    %v1165 = vadd.f32 %v1164, %v1162
    %v1166 = vadd.f32 %v1165, %v1163
    %v1167 = vrot.slane %v1166, 4
    %v1168 = vadd.f32 %v1166, %v1167
    %v1169 = vrot.slane %v1168, 2
    %v1170 = vadd.f32 %v1168, %v1169
    %v1171 = vrot.slane %v1170, 1
    %v1172 = vadd.f32 %v1170, %v1171
    %1173 = vmatprep.subr.mxu0 0.0
    %1174 = vmatpush1.msra.mxu0 %v298
    %1175 = vmatprep.subr.mxu0 0.0
    %1176 = vmatpush1.msra.mxu0 %v299
    %1177 = vmatprep.subr.mxu0 0.0
    %1178 = vmatpush1.msra.mxu0 %v300
    %1179 = vmatprep.subr.mxu0 0.0
    %1180 = vmatpush1.msra.mxu0 %v301
    %1181 = vmatprep.subr.mxu0 0.0
    %1182 = vmatpush1.msra.mxu0 %v302
    %1183 = vmatprep.subr.mxu0 0.0
    %1184 = vmatpush1.msra.mxu0 %v303
    %1185 = vmatprep.subr.mxu0 0.0
    %1186 = vmatpush1.msra.mxu0 %v304
    %1187 = vmatprep.subr.mxu0 0.0
    %1188 = vmatpush1.msra.mxu0 %v305
    %1189 = vmatprep.subr.mxu0 0.0
    %1190 = vmatpush1.msra.mxu0 %v306
    %1191 = vmatprep.subr.mxu0 0.0
    %1192 = vmatpush1.msra.mxu0 %v307
    %1193 = vmatprep.subr.mxu0 0.0
    %1194 = vmatpush1.msra.mxu0 %v308
    %1195 = vmatprep.subr.mxu0 0.0
    %1196 = vmatpush1.msra.mxu0 %v309
    %1197 = vmatprep.subr.mxu0 0.0
    %1198 = vmatpush1.msra.mxu0 %v310
    %1199 = vmatprep.subr.mxu0 0.0
    %1200 = vmatpush1.msra.mxu0 %v311
    %1201 = vmatprep.subr.mxu0 0.0
    %1202 = vmatpush1.msra.mxu0 %v312
    %1203 = vmatprep.subr.mxu0 0.0
    %1204 = vmatpush1.msra.mxu0 %v313
    %1205 = vmatprep.subr.mxu0 0.0
    %1206 = vmatpush1.msra.mxu0 0.0
    %1207 = vmatprep.subr.mxu0 0.0
    %1208 = vmatpush1.msra.mxu0 0.0
    %1209 = vmatprep.subr.mxu0 0.0
    %1210 = vmatpush1.msra.mxu0 0.0
    %1211 = vmatprep.subr.mxu0 0.0
    %1212 = vmatpush1.msra.mxu0 0.0
    %1213 = vmatprep.subr.mxu0 0.0
    %1214 = vmatpush1.msra.mxu0 0.0
    %1215 = vmatprep.subr.mxu0 0.0
    %1216 = vmatpush1.msra.mxu0 0.0
    %1217 = vmatprep.subr.mxu0 0.0
    %1218 = vmatpush1.msra.mxu0 0.0
    %1219 = vmatprep.subr.mxu0 0.0
    %1220 = vmatpush1.msra.mxu0 0.0
    %1221 = vmatprep.subr.mxu0 0.0
    %1222 = vmatpush1.msra.mxu0 0.0
    %1223 = vmatprep.subr.mxu0 0.0
    %1224 = vmatpush1.msra.mxu0 0.0
    %1225 = vmatprep.subr.mxu0 0.0
    %1226 = vmatpush1.msra.mxu0 0.0
    %1227 = vmatprep.subr.mxu0 0.0
    %1228 = vmatpush1.msra.mxu0 0.0
    %1229 = vmatprep.subr.mxu0 0.0
    %1230 = vmatpush1.msra.mxu0 0.0
    %1231 = vmatprep.subr.mxu0 0.0
    %1232 = vmatpush1.msra.mxu0 0.0
    %1233 = vmatprep.subr.mxu0 0.0
    %1234 = vmatpush1.msra.mxu0 0.0
    %1235 = vmatprep.subr.mxu0 0.0
    %1236 = vmatpush1.msra.mxu0 0.0
    %1237 = vmatprep.mubr.f32.mxu0 0.0
    %1238 = vmatmul.mubr.f32.gmra.mrb[0].mxu0 %v1172
    %v1239 = vpop.f32.mrb[0].mxu0
    %v1240 = vadd.f32 0.0, %v1239
    %v1241 = vpop.f32.mrb[0].mxu0
    %1242 = vdwg.mxu0
    %v1243 = vlaneseq
    %v1244 = vshrl.u32 %v1243, 7
    %v1245 = vsub.s32 0, %v1244
    %v1246 = vrot.slane %v1240, %v1245
    %v1247 = vsub.f32 %v1160, %v1246
    %v1248 = vsub.f32 %v1161, %v1246
    %v1249 = vsub.f32 %v1162, %v1246
    %v1250 = vsub.f32 %v1163, %v1246
    %v1251 = vmul.f32 %v1247, %v1247
    %v1252 = vmul.f32 %v1248, %v1248
    %v1253 = vmul.f32 %v1249, %v1249
    %v1254 = vmul.f32 %v1250, %v1250
    %v1255 = vadd.f32 %v1251, %v1252
    %v1256 = vadd.f32 %v1255, %v1253
    %v1257 = vadd.f32 %v1256, %v1254
    %v1258 = vrot.slane %v1257, 4
    %v1259 = vadd.f32 %v1257, %v1258
    %v1260 = vrot.slane %v1259, 2
    %v1261 = vadd.f32 %v1259, %v1260
    %v1262 = vrot.slane %v1261, 1
    %v1263 = vadd.f32 %v1261, %v1262
    %1264 = vmatprep.subr.mxu0 0.0
    %1265 = vmatpush1.msra.mxu0 %v298
    %1266 = vmatprep.subr.mxu0 0.0
    %1267 = vmatpush1.msra.mxu0 %v299
    %1268 = vmatprep.subr.mxu0 0.0
    %1269 = vmatpush1.msra.mxu0 %v300
    %1270 = vmatprep.subr.mxu0 0.0
    %1271 = vmatpush1.msra.mxu0 %v301
    %1272 = vmatprep.subr.mxu0 0.0
    %1273 = vmatpush1.msra.mxu0 %v302
    %1274 = vmatprep.subr.mxu0 0.0
    %1275 = vmatpush1.msra.mxu0 %v303
    %1276 = vmatprep.subr.mxu0 0.0
    %1277 = vmatpush1.msra.mxu0 %v304
    %1278 = vmatprep.subr.mxu0 0.0
    %1279 = vmatpush1.msra.mxu0 %v305
    %1280 = vmatprep.subr.mxu0 0.0
    %1281 = vmatpush1.msra.mxu0 %v306
    %1282 = vmatprep.subr.mxu0 0.0
    %1283 = vmatpush1.msra.mxu0 %v307
    %1284 = vmatprep.subr.mxu0 0.0
    %1285 = vmatpush1.msra.mxu0 %v308
    %1286 = vmatprep.subr.mxu0 0.0
    %1287 = vmatpush1.msra.mxu0 %v309
    %1288 = vmatprep.subr.mxu0 0.0
    %1289 = vmatpush1.msra.mxu0 %v310
    %1290 = vmatprep.subr.mxu0 0.0
    %1291 = vmatpush1.msra.mxu0 %v311
    %1292 = vmatprep.subr.mxu0 0.0
    %1293 = vmatpush1.msra.mxu0 %v312
    %1294 = vmatprep.subr.mxu0 0.0
    %1295 = vmatpush1.msra.mxu0 %v313
    %1296 = vmatprep.subr.mxu0 0.0
    %1297 = vmatpush1.msra.mxu0 0.0
    %1298 = vmatprep.subr.mxu0 0.0
    %1299 = vmatpush1.msra.mxu0 0.0
    %1300 = vmatprep.subr.mxu0 0.0
    %1301 = vmatpush1.msra.mxu0 0.0
    %1302 = vmatprep.subr.mxu0 0.0
    %1303 = vmatpush1.msra.mxu0 0.0
    %1304 = vmatprep.subr.mxu0 0.0
    %1305 = vmatpush1.msra.mxu0 0.0
    %1306 = vmatprep.subr.mxu0 0.0
    %1307 = vmatpush1.msra.mxu0 0.0
    %1308 = vmatprep.subr.mxu0 0.0
    %1309 = vmatpush1.msra.mxu0 0.0
    %1310 = vmatprep.subr.mxu0 0.0
    %1311 = vmatpush1.msra.mxu0 0.0
    %1312 = vmatprep.subr.mxu0 0.0
    %1313 = vmatpush1.msra.mxu0 0.0
    %1314 = vmatprep.subr.mxu0 0.0
    %1315 = vmatpush1.msra.mxu0 0.0
    %1316 = vmatprep.subr.mxu0 0.0
    %1317 = vmatpush1.msra.mxu0 0.0
    %1318 = vmatprep.subr.mxu0 0.0
    %1319 = vmatpush1.msra.mxu0 0.0
    %1320 = vmatprep.subr.mxu0 0.0
    %1321 = vmatpush1.msra.mxu0 0.0
    %1322 = vmatprep.subr.mxu0 0.0
    %1323 = vmatpush1.msra.mxu0 0.0
    %1324 = vmatprep.subr.mxu0 0.0
    %1325 = vmatpush1.msra.mxu0 0.0
    %1326 = vmatprep.subr.mxu0 0.0
    %1327 = vmatpush1.msra.mxu0 0.0
    %1328 = vmatprep.mubr.f32.mxu0 0.0
    %1329 = vmatmul.mubr.f32.gmra.mrb[0].mxu0 %v1263
    %v1330 = vpop.f32.mrb[0].mxu0
    %v1331 = vadd.f32 1e-05, %v1330
    %v1332 = vpop.f32.mrb[0].mxu0
    %1333 = vdwg.mxu0
    %v1334 = vrsqrt.pop %v1331
    %v1335 = vmul.f32 %v316, %v1334
    %v1336 = vlaneseq
    %v1337 = vshrl.u32 %v1336, 7
    %v1338 = vsub.s32 0, %v1337
    %v1339 = vrot.slane %v1335, %v1338
    %v1340 = vmul.f32 %v1247, %v1339
    %v1341 = vmul.f32 %v1248, %v1339
    %v1342 = vmul.f32 %v1249, %v1339
    %v1343 = vmul.f32 %v1250, %v1339
    %v1344 = vlaneseq
    %v1345 = vshrl.u32 %v1344, 7
    %v1346 = vsub.s32 0, %v1345
    %v1347 = vrot.slane %v317, %v1346
    %v1348 = vadd.f32 %v1340, %v1347
    %v1349 = vadd.f32 %v1341, %v1347
    %v1350 = vadd.f32 %v1342, %v1347
    %v1351 = vadd.f32 %v1343, %v1347
    %v1352 = vld [vmem:[#allocation3] sm:$0xff]
    %v1353 = vld [vmem:[#allocation3 + $0x8] sm:$0xff]
    %v1354 = vld [vmem:[#allocation3 + $0x10] sm:$0xff]
    %v1355 = vld [vmem:[#allocation3 + $0x18] sm:$0xff]
    %v1356 = vadd.f32 %v1348, %v1352
    %v1357 = vadd.f32 %v1349, %v1353
    %v1358 = vadd.f32 %v1350, %v1354
    %v1359 = vadd.f32 %v1351, %v1355
    %v1360 = vmax.f32 %v1356, 0.0
    %v1361 = vmax.f32 %v1357, 0.0
    %v1362 = vmax.f32 %v1358, 0.0
    %v1363 = vmax.f32 %v1359, 0.0
    %1364 = vst [vmem:[#allocation9] sm:$0xff] %v1360
    %1365 = vst [vmem:[#allocation9 + $0x8] sm:$0xff] %v1361
    %1366 = vst [vmem:[#allocation9 + $0x10] sm:$0xff] %v1362
    %1367 = vst [vmem:[#allocation9 + $0x18] sm:$0xff] %v1363
    // Predicated region
    $region30: #{tpu_custom_call.1} parent=1 // pred_check
      _
    $region31: #{tpu_custom_call.1} parent=1 // pred_check_branch
      %1369 = sbr.rel (0) target = $region33
    $region32: #{tpu_custom_call.1} parent=1 // pred_region
      %s1371 = ssub.s32 512, 512
      %1372 = vsyncadd [#allocation5], %s1371
      %s1373 = sshll.u32 [#allocation9], 4
      %s1374 = int_to_ptr.vmem [resolvable:$true] %s1373
      %1379 = dma.vmem_to_hbm [thread:$0]  %s1374, 512, %s4, [#allocation5], 128, 128, 8
    $region33: #{tpu_custom_call.1} parent=1 // pred_fallthru
      _
    // Predicated region
    $region34: #{tpu_custom_call.1} parent=1 // pred_check
      _
    $region35: #{tpu_custom_call.1} parent=1 // pred_check_branch
      %1381 = sbr.rel (0) target = $region37
    $region36: #{tpu_custom_call.1} parent=1 // pred_region
      %1382 = dma.done [#allocation5], 512
    $region37: #{tpu_custom_call.1} parent=1 // pred_fallthru
      _
    %1383 = vsyncpa [#allocation4], 1
    %1384 = vsyncpa [#allocation7], 1
    %1385 = vsyncpa [#allocation5], 1

</llo_original>
